<compile_context>
chip_gen: v6e
topology: v6e:2x2x1
jax: 0.10.0
libtpu: 0.0.40
codegen_flags: <defaults>
</compile_context>

<pallas_src>
import jax
import jax.numpy as jnp
from jax.experimental import pallas as pl
from jax.experimental.pallas import tpu as pltpu


def catfusion_kernel(xg_ref, xp_ref, xc_ref,
                     w1g_ref, w1p_ref, w1c_ref, b1_ref,
                     w2_ref, b2_ref,
                     w3_ref, b3_ref,
                     out_ref):
    # ---- layer 1: fused concat + Linear(3*in -> 512) + ReLU ---------------
    # cat([xg, xp, xc]) @ W1  ==  xg @ W1g + xp @ W1p + xc @ W1c
    h1 = jnp.dot(xg_ref[...], w1g_ref[...], preferred_element_type=jnp.float32)
    h1 = h1 + jnp.dot(xp_ref[...], w1p_ref[...],
                      preferred_element_type=jnp.float32)
    h1 = h1 + jnp.dot(xc_ref[...], w1c_ref[...],
                      preferred_element_type=jnp.float32)
    h1 = jnp.maximum(h1 + b1_ref[...], 0.0).astype(jnp.bfloat16)   # (tb, 512)
    # TODO(synk): nn.Dropout is identity in eval mode; train-mode dropout
    # would need pltpu.prng_seed + pltpu.stateful_bernoulli and a seed input.

    # ---- layer 2: Linear(512 -> 256) + ReLU -------------------------------
    h2 = jnp.dot(h1, w2_ref[...], preferred_element_type=jnp.float32)
    h2 = jnp.maximum(h2 + b2_ref[...], 0.0).astype(jnp.bfloat16)   # (tb, 256)

    # ---- layer 3: Linear(256 -> 128) + ReLU -------------------------------
    h3 = jnp.dot(h2, w3_ref[...], preferred_element_type=jnp.float32)
    h3 = jnp.maximum(h3 + b3_ref[...], 0.0)                        # (tb, 128)

    out_ref[...] = h3.astype(out_ref.dtype)


def _choose_tile(B, tb_req):
    """Pick an MXU/sublane-friendly batch tile."""
    tb = min(tb_req, B)
    # Prefer >= 2 grid steps for big batches so the v7x megacore can shard
    # the "parallel" batch axis across both TensorCores.
    if B >= 512 and B // tb < 2:
        tb = max(256, tb // 2)
    if tb >= 256:
        tb -= tb % 256          # fill the 256-wide v6e/v7x MXU M dimension
    else:
        tb = ((tb + 15) // 16) * 16   # bf16 sublane packing
    return max(tb, 16)


def catfusion_forward(x_gene, x_path, x_cna, w1, b1, w2, b2, w3, b3, *, tb=512):
    """Fused CatFusion forward.

    x_gene/x_path/x_cna : (B, in_size) f32
    w1 : (3*in_size, 512)   b1 : (1, 512)
    w2 : (512, 256)         b2 : (1, 256)
    w3 : (256, 128)         b3 : (1, 128)
    """
    B, in_size = x_gene.shape
    F1 = w1.shape[1]
    F2 = w2.shape[1]
    F3 = w3.shape[1]

    # Split W1 so the concat is fused into the matmul (no cat materialized),
    # and cast weights/inputs to bf16 (f32 accumulation inside the kernel).
    w1g = w1[:in_size].astype(jnp.bfloat16)
    w1p = w1[in_size:2 * in_size].astype(jnp.bfloat16)
    w1c = w1[2 * in_size:].astype(jnp.bfloat16)
    w2b = w2.astype(jnp.bfloat16)
    w3b = w3.astype(jnp.bfloat16)
    xg = x_gene.astype(jnp.bfloat16)
    xp = x_path.astype(jnp.bfloat16)
    xc = x_cna.astype(jnp.bfloat16)

    tb = _choose_tile(B, tb)

    # Ragged batch: pad up to a tile multiple (no single-giant-tile fallback).
    n_tiles = pl.cdiv(B, tb)
    B_pad = n_tiles * tb
    if B_pad != B:
        pad = ((0, B_pad - B), (0, 0))
        xg = jnp.pad(xg, pad)
        xp = jnp.pad(xp, pad)
        xc = jnp.pad(xc, pad)

    row = lambda i: (i, 0)     # batch-tiled operands
    whole = lambda i: (0, 0)   # weights/biases: resident across grid steps
    resident = dict(pipeline_mode=pl.Buffered(1))   # single-buffered weights

    out = pl.pallas_call(
        catfusion_kernel,
        out_shape=jax.ShapeDtypeStruct((B_pad, F3), jnp.float32),
        grid_spec=pltpu.PrefetchScalarGridSpec(
            num_scalar_prefetch=0,
            grid=(n_tiles,),
            in_specs=[
                pl.BlockSpec((tb, in_size), row),                 # x_gene
                pl.BlockSpec((tb, in_size), row),                 # x_path
                pl.BlockSpec((tb, in_size), row),                 # x_cna
                pl.BlockSpec((in_size, F1), whole, **resident),   # W1 (gene)
                pl.BlockSpec((in_size, F1), whole, **resident),   # W1 (path)
                pl.BlockSpec((in_size, F1), whole, **resident),   # W1 (cna)
                pl.BlockSpec((1, F1), whole, **resident),         # b1
                pl.BlockSpec((F1, F2), whole, **resident),        # W2
                pl.BlockSpec((1, F2), whole, **resident),         # b2
                pl.BlockSpec((F2, F3), whole, **resident),        # W3
                pl.BlockSpec((1, F3), whole, **resident),         # b3
            ],
            out_specs=pl.BlockSpec((tb, F3), row),
        ),
        compiler_params=pltpu.CompilerParams(
            dimension_semantics=("parallel",),        # batch tiles -> megacore
            vmem_limit_bytes=48 * 1024 * 1024,        # > default, < v7x 64 MiB
        ),
    )(xg, xp, xc, w1g, w1p, w1c, b1, w2b, b2, w3b, b3)

    if B_pad != B:
        out = out[:B]
    return out


def reference_forward(x_gene, x_path, x_cna, w1, b1, w2, b2, w3, b3):
    # Pure-JAX mirror of the torch forward (eval mode: dropout = identity).
    cat = jnp.concatenate([x_gene, x_path, x_cna], axis=1)
    h1 = jnp.maximum(cat @ w1 + b1, 0.0)
    h2 = jnp.maximum(h1 @ w2 + b2, 0.0)
    h3 = jnp.maximum(h2 @ w3 + b3, 0.0)
    return h3


if __name__ == "__main__":
    # Small, lane-friendly test shapes: batch=16, in_size=128 per modality
    # (3*128 = 384 concat features), hidden 512 -> 256 -> 128.
    B, in_size = 16, 128
    H1, H2, H3 = 512, 256, 128

    key = jax.random.PRNGKey(0)
    keys = jax.random.split(key, 9)

    xg = jax.random.normal(keys[0], (B, in_size), dtype=jnp.float32)
    xp = jax.random.normal(keys[1], (B, in_size), dtype=jnp.float32)
    xc = jax.random.normal(keys[2], (B, in_size), dtype=jnp.float32)

    def linear_init(kw, kb, fin, fout):
        # torch nn.Linear default init range, stored pre-transposed (fin, fout)
        bound = 1.0 / jnp.sqrt(fin)
        w = jax.random.uniform(kw, (fin, fout), jnp.float32, -bound, bound)
        b = jax.random.uniform(kb, (1, fout), jnp.float32, -bound, bound)
        return w, b

    w1, b1 = linear_init(keys[3], keys[4], 3 * in_size, H1)
    w2, b2 = linear_init(keys[5], keys[6], H1, H2)
    w3, b3 = linear_init(keys[7], keys[8], H2, H3)

    out = catfusion_forward(xg, xp, xc, w1, b1, w2, b2, w3, b3)
    out = jax.block_until_ready(out)

    ref = reference_forward(xg, xp, xc, w1, b1, w2, b2, w3, b3)
    assert out.shape == (B, H3)
    # bf16 inputs/weights with f32 accumulation -> looser tolerance.
    assert jnp.allclose(out, ref, atol=3e-2, rtol=3e-2), "mismatch vs reference"

    print("KERNEL_OK")
</pallas_src>

<mosaic_0001>
module attributes {stable_mosaic.version = 11 : i64} {
  func.func @catfusion_kernel(%arg0: i32, %arg1: memref<16x128xbf16, #tpu.memory_space<vmem>>, %arg2: memref<16x128xbf16, #tpu.memory_space<vmem>>, %arg3: memref<16x128xbf16, #tpu.memory_space<vmem>>, %arg4: memref<128x512xbf16, #tpu.memory_space<vmem>>, %arg5: memref<128x512xbf16, #tpu.memory_space<vmem>>, %arg6: memref<128x512xbf16, #tpu.memory_space<vmem>>, %arg7: memref<1x512xf32, #tpu.memory_space<vmem>>, %arg8: memref<512x256xbf16, #tpu.memory_space<vmem>>, %arg9: memref<1x256xf32, #tpu.memory_space<vmem>>, %arg10: memref<256x128xbf16, #tpu.memory_space<vmem>>, %arg11: memref<1x128xf32, #tpu.memory_space<vmem>>, %arg12: memref<16x128xf32, #tpu.memory_space<vmem>>) attributes {dimension_semantics = [#tpu.dimension_semantics<parallel>], iteration_bounds = array<i64: 1>, scalar_prefetch = 0 : i64, scratch_operands = 0 : i64, tpu.core_type = #tpu.core_type<tc>, window_params = [{transform_indices = @transform_0, window_bounds = array<i64: 16, 128>}, {transform_indices = @transform_1, window_bounds = array<i64: 16, 128>}, {transform_indices = @transform_2, window_bounds = array<i64: 16, 128>}, {pipeline_mode = #tpu.pipeline_mode<synchronous>, transform_indices = @transform_3, window_bounds = array<i64: 128, 512>}, {pipeline_mode = #tpu.pipeline_mode<synchronous>, transform_indices = @transform_4, window_bounds = array<i64: 128, 512>}, {pipeline_mode = #tpu.pipeline_mode<synchronous>, transform_indices = @transform_5, window_bounds = array<i64: 128, 512>}, {pipeline_mode = #tpu.pipeline_mode<synchronous>, transform_indices = @transform_6, window_bounds = array<i64: 1, 512>}, {pipeline_mode = #tpu.pipeline_mode<synchronous>, transform_indices = @transform_7, window_bounds = array<i64: 512, 256>}, {pipeline_mode = #tpu.pipeline_mode<synchronous>, transform_indices = @transform_8, window_bounds = array<i64: 1, 256>}, {pipeline_mode = #tpu.pipeline_mode<synchronous>, transform_indices = @transform_9, window_bounds = array<i64: 256, 128>}, {pipeline_mode = #tpu.pipeline_mode<synchronous>, transform_indices = @transform_10, window_bounds = array<i64: 1, 128>}, {transform_indices = @transform_11, window_bounds = array<i64: 16, 128>}]} {
    %c0 = arith.constant 0 : index
    %c0_0 = arith.constant 0 : index
    %0 = vector.load %arg1[%c0, %c0_0] : memref<16x128xbf16, #tpu.memory_space<vmem>>, vector<16x128xbf16>
    %c0_1 = arith.constant 0 : index
    %c0_2 = arith.constant 0 : index
    %1 = vector.load %arg4[%c0_1, %c0_2] : memref<128x512xbf16, #tpu.memory_space<vmem>>, vector<128x512xbf16>
    %cst = arith.constant dense<0.000000e+00> : vector<16x512xf32>
    %2 = tpu.matmul %0, %1, %cst {dimension_numbers = #tpu.dot_dimension_numbers<[1], [0], [0], [1], [0, 0, 1, 1], [], []>} : vector<16x128xbf16>, vector<128x512xbf16>, vector<16x512xf32> -> vector<16x512xf32>
    %c0_3 = arith.constant 0 : index
    %c0_4 = arith.constant 0 : index
    %3 = vector.load %arg2[%c0_3, %c0_4] : memref<16x128xbf16, #tpu.memory_space<vmem>>, vector<16x128xbf16>
    %c0_5 = arith.constant 0 : index
    %c0_6 = arith.constant 0 : index
    %4 = vector.load %arg5[%c0_5, %c0_6] : memref<128x512xbf16, #tpu.memory_space<vmem>>, vector<128x512xbf16>
    %cst_7 = arith.constant dense<0.000000e+00> : vector<16x512xf32>
    %5 = tpu.matmul %3, %4, %cst_7 {dimension_numbers = #tpu.dot_dimension_numbers<[1], [0], [0], [1], [0, 0, 1, 1], [], []>} : vector<16x128xbf16>, vector<128x512xbf16>, vector<16x512xf32> -> vector<16x512xf32>
    %6 = arith.addf %2, %5 : vector<16x512xf32>
    %c0_8 = arith.constant 0 : index
    %c0_9 = arith.constant 0 : index
    %7 = vector.load %arg3[%c0_8, %c0_9] : memref<16x128xbf16, #tpu.memory_space<vmem>>, vector<16x128xbf16>
    %c0_10 = arith.constant 0 : index
    %c0_11 = arith.constant 0 : index
    %8 = vector.load %arg6[%c0_10, %c0_11] : memref<128x512xbf16, #tpu.memory_space<vmem>>, vector<128x512xbf16>
    %cst_12 = arith.constant dense<0.000000e+00> : vector<16x512xf32>
    %9 = tpu.matmul %7, %8, %cst_12 {dimension_numbers = #tpu.dot_dimension_numbers<[1], [0], [0], [1], [0, 0, 1, 1], [], []>} : vector<16x128xbf16>, vector<128x512xbf16>, vector<16x512xf32> -> vector<16x512xf32>
    %10 = arith.addf %6, %9 : vector<16x512xf32>
    %c0_13 = arith.constant 0 : index
    %c0_14 = arith.constant 0 : index
    %11 = vector.load %arg7[%c0_13, %c0_14] : memref<1x512xf32, #tpu.memory_space<vmem>>, vector<1x512xf32>
    %12 = vector.broadcast %11 : vector<1x512xf32> to vector<16x512xf32>
    %13 = arith.addf %10, %12 : vector<16x512xf32>
    %cst_15 = arith.constant 0.000000e+00 : f32
    %14 = vector.broadcast %cst_15 : f32 to vector<16x512xf32>
    %15 = arith.maximumf %13, %14 : vector<16x512xf32>
    %16 = arith.truncf %15 : vector<16x512xf32> to vector<16x512xbf16>
    %c0_16 = arith.constant 0 : index
    %c0_17 = arith.constant 0 : index
    %17 = vector.load %arg8[%c0_16, %c0_17] : memref<512x256xbf16, #tpu.memory_space<vmem>>, vector<512x256xbf16>
    %cst_18 = arith.constant dense<0.000000e+00> : vector<16x256xf32>
    %18 = tpu.matmul %16, %17, %cst_18 {dimension_numbers = #tpu.dot_dimension_numbers<[1], [0], [0], [1], [0, 0, 1, 1], [], []>} : vector<16x512xbf16>, vector<512x256xbf16>, vector<16x256xf32> -> vector<16x256xf32>
    %c0_19 = arith.constant 0 : index
    %c0_20 = arith.constant 0 : index
    %19 = vector.load %arg9[%c0_19, %c0_20] : memref<1x256xf32, #tpu.memory_space<vmem>>, vector<1x256xf32>
    %20 = vector.broadcast %19 : vector<1x256xf32> to vector<16x256xf32>
    %21 = arith.addf %18, %20 : vector<16x256xf32>
    %cst_21 = arith.constant 0.000000e+00 : f32
    %22 = vector.broadcast %cst_21 : f32 to vector<16x256xf32>
    %23 = arith.maximumf %21, %22 : vector<16x256xf32>
    %24 = arith.truncf %23 : vector<16x256xf32> to vector<16x256xbf16>
    %c0_22 = arith.constant 0 : index
    %c0_23 = arith.constant 0 : index
    %25 = vector.load %arg10[%c0_22, %c0_23] : memref<256x128xbf16, #tpu.memory_space<vmem>>, vector<256x128xbf16>
    %cst_24 = arith.constant dense<0.000000e+00> : vector<16x128xf32>
    %26 = tpu.matmul %24, %25, %cst_24 {dimension_numbers = #tpu.dot_dimension_numbers<[1], [0], [0], [1], [0, 0, 1, 1], [], []>} : vector<16x256xbf16>, vector<256x128xbf16>, vector<16x128xf32> -> vector<16x128xf32>
    %c0_25 = arith.constant 0 : index
    %c0_26 = arith.constant 0 : index
    %27 = vector.load %arg11[%c0_25, %c0_26] : memref<1x128xf32, #tpu.memory_space<vmem>>, vector<1x128xf32>
    %28 = vector.broadcast %27 : vector<1x128xf32> to vector<16x128xf32>
    %29 = arith.addf %26, %28 : vector<16x128xf32>
    %cst_27 = arith.constant 0.000000e+00 : f32
    %30 = vector.broadcast %cst_27 : f32 to vector<16x128xf32>
    %31 = arith.maximumf %29, %30 : vector<16x128xf32>
    %c0_28 = arith.constant 0 : index
    %c0_29 = arith.constant 0 : index
    %32 = vector.load %arg12[%c0_28, %c0_29] : memref<16x128xf32, #tpu.memory_space<vmem>>, vector<16x128xf32>
    tpu.vector_store %arg12[%c0_28, %c0_29], %31 {strides = array<i32>} : memref<16x128xf32, #tpu.memory_space<vmem>>, vector<16x128xf32>,
    return
  }
  func.func @transform_0(%arg0: i32) -> (i32, i32) {
    %c0_i32 = arith.constant 0 : i32
    %c0_i32_0 = arith.constant 0 : i32
    return %arg0, %c0_i32 : i32, i32
  }
  func.func @transform_1(%arg0: i32) -> (i32, i32) {
    %c0_i32 = arith.constant 0 : i32
    %c0_i32_0 = arith.constant 0 : i32
    return %arg0, %c0_i32 : i32, i32
  }
  func.func @transform_2(%arg0: i32) -> (i32, i32) {
    %c0_i32 = arith.constant 0 : i32
    %c0_i32_0 = arith.constant 0 : i32
    return %arg0, %c0_i32 : i32, i32
  }
  func.func @transform_3(%arg0: i32) -> (i32, i32) {
    %c0_i32 = arith.constant 0 : i32
    %c0_i32_0 = arith.constant 0 : i32
    %c0_i32_1 = arith.constant 0 : i32
    return %c0_i32, %c0_i32_0 : i32, i32
  }
  func.func @transform_4(%arg0: i32) -> (i32, i32) {
    %c0_i32 = arith.constant 0 : i32
    %c0_i32_0 = arith.constant 0 : i32
    %c0_i32_1 = arith.constant 0 : i32
    return %c0_i32, %c0_i32_0 : i32, i32
  }
  func.func @transform_5(%arg0: i32) -> (i32, i32) {
    %c0_i32 = arith.constant 0 : i32
    %c0_i32_0 = arith.constant 0 : i32
    %c0_i32_1 = arith.constant 0 : i32
    return %c0_i32, %c0_i32_0 : i32, i32
  }
  func.func @transform_6(%arg0: i32) -> (i32, i32) {
    %c0_i32 = arith.constant 0 : i32
    %c0_i32_0 = arith.constant 0 : i32
    %c0_i32_1 = arith.constant 0 : i32
    return %c0_i32, %c0_i32_0 : i32, i32
  }
  func.func @transform_7(%arg0: i32) -> (i32, i32) {
    %c0_i32 = arith.constant 0 : i32
    %c0_i32_0 = arith.constant 0 : i32
    %c0_i32_1 = arith.constant 0 : i32
    return %c0_i32, %c0_i32_0 : i32, i32
  }
  func.func @transform_8(%arg0: i32) -> (i32, i32) {
    %c0_i32 = arith.constant 0 : i32
    %c0_i32_0 = arith.constant 0 : i32
    %c0_i32_1 = arith.constant 0 : i32
    return %c0_i32, %c0_i32_0 : i32, i32
  }
  func.func @transform_9(%arg0: i32) -> (i32, i32) {
    %c0_i32 = arith.constant 0 : i32
    %c0_i32_0 = arith.constant 0 : i32
    %c0_i32_1 = arith.constant 0 : i32
    return %c0_i32, %c0_i32_0 : i32, i32
  }
  func.func @transform_10(%arg0: i32) -> (i32, i32) {
    %c0_i32 = arith.constant 0 : i32
    %c0_i32_0 = arith.constant 0 : i32
    %c0_i32_1 = arith.constant 0 : i32
    return %c0_i32, %c0_i32_0 : i32, i32
  }
  func.func @transform_11(%arg0: i32) -> (i32, i32) {
    %c0_i32 = arith.constant 0 : i32
    %c0_i32_0 = arith.constant 0 : i32
    return %arg0, %c0_i32 : i32, i32
  }
}

</mosaic_0001>

<llo_original>
// kernel: tpu_custom_call.1
$region0: #{tpu_custom_call.1}
  #allocation0 [shape = 'u32[]', space=smem, size = 0x4, offset = 0x4, fixed_abs, tag = 'smem constant byte address 0x4 - core index']
  #allocation1 [shape = 'u32[144,128]{1,0:T(1,128)}', space=vmem, size = 0x12000, scoped, tag = 'internal scratch']
  %s0 = inlined_call_operand.hbm [shape: bf16[16,128], index: 0, kind: input, shape index: {}]
  %s1 = inlined_call_operand.hbm [shape: bf16[16,128], index: 1, kind: input, shape index: {}]
  %s2 = inlined_call_operand.hbm [shape: bf16[16,128], index: 2, kind: input, shape index: {}]
  %s3 = inlined_call_operand.hbm [shape: bf16[128,512], index: 3, kind: input, shape index: {}]
  %s4 = inlined_call_operand.hbm [shape: bf16[128,512], index: 4, kind: input, shape index: {}]
  %s5 = inlined_call_operand.hbm [shape: bf16[128,512], index: 5, kind: input, shape index: {}]
  %s6 = inlined_call_operand.vmem [shape: f32[1,512], index: 6, kind: input, shape index: {}]
  %s7 = inlined_call_operand.hbm [shape: bf16[512,256], index: 7, kind: input, shape index: {}]
  %s8 = inlined_call_operand.vmem [shape: f32[1,256], index: 8, kind: input, shape index: {}]
  %s9 = inlined_call_operand.hbm [shape: bf16[256,128], index: 9, kind: input, shape index: {}]
  %s10 = inlined_call_operand.vmem [shape: f32[1,128], index: 10, kind: input, shape index: {}]
  %s11 = inlined_call_operand.hbm [shape: f32[16,128], index: 11, kind: output, shape index: {}]
  %s12 = sld [smem:[#allocation0]]
  $region86: #{tpu_custom_call.1} parent=0
    _
  %s14 = ssub.s32 1, %s12
  %s15 = scalar_select 0, %s14, %s12
  $region1: #{tpu_custom_call.1} parent=0
    #allocation2 [shape = 'u8[4096]{0}', space=vmem, size = 0x1000, scoped, tag = 'input window, operand 0, single buffered']
    #allocation3 [shape = 's32[1]{0}', space=sflag, size = 0x4, scoped, tag = 'scoped memory for tpu_custom_call.1']
    #allocation4 [shape = 's32[1]{0}', space=sflag, size = 0x4, scoped, tag = 'scoped memory for tpu_custom_call.1']
    #allocation5 [shape = 'u8[4096]{0}', space=vmem, size = 0x1000, scoped, tag = 'input window, operand 1, single buffered']
    #allocation6 [shape = 's32[1]{0}', space=sflag, size = 0x4, scoped, tag = 'scoped memory for tpu_custom_call.1']
    #allocation7 [shape = 'u8[4096]{0}', space=vmem, size = 0x1000, scoped, tag = 'input window, operand 2, single buffered']
    #allocation8 [shape = 'u8[131072]{0}', space=vmem, size = 0x20000, scoped, tag = 'input window, operand 3, single buffered']
    #allocation9 [shape = 's32[1]{0}', space=sflag, size = 0x4, scoped, tag = 'scoped memory for tpu_custom_call.1']
    #allocation10 [shape = 'u8[131072]{0}', space=vmem, size = 0x20000, scoped, tag = 'input window, operand 4, single buffered']
    #allocation11 [shape = 'u8[131072]{0}', space=vmem, size = 0x20000, scoped, tag = 'input window, operand 5, single buffered']
    #allocation12 [shape = 's32[1]{0}', space=sflag, size = 0x4, scoped, tag = 'scoped memory for tpu_custom_call.1']
    #allocation13 [shape = 'u8[262144]{0}', space=vmem, size = 0x40000, scoped, tag = 'input window, operand 7, single buffered']
    #allocation14 [shape = 'u8[65536]{0}', space=vmem, size = 0x10000, scoped, tag = 'input window, operand 9, single buffered']
    #allocation15 [shape = 's32[1]{0}', space=sflag, size = 0x4, scoped, tag = 'scoped memory for tpu_custom_call.1']
    #allocation16 [shape = 'u8[8192]{0}', space=vmem, size = 0x2000, scoped, tag = 'output window, operand 0, single buffered']
    %16 = vsyncpa [#allocation3], 0
    %17 = vsyncpa [#allocation6], 0
    %18 = vsyncpa [#allocation9], 0
    %19 = vsyncpa [#allocation12], 0
    %20 = vsyncpa [#allocation15], 0
    %21 = vsyncpa [#allocation4], 0
    // Predicated region
    $region2: #{tpu_custom_call.1} parent=1 // pred_check
      _
    $region3: #{tpu_custom_call.1} parent=1 // pred_check_branch
      %23 = sbr.rel (0) target = $region5
    $region4: #{tpu_custom_call.1} parent=1 // pred_region
      %s25 = ssub.s32 128, 128
      %26 = vsyncadd [#allocation3], %s25
      %s27 = sshll.u32 [#allocation2], 4
      %s28 = int_to_ptr.vmem [resolvable:$true] %s27
      %33 = dma.hbm_to_vmem [thread:$0]  %s0, 128, %s28, [#allocation3], 64, 64, 4
    $region5: #{tpu_custom_call.1} parent=1 // pred_fallthru
      _
    // Predicated region
    $region6: #{tpu_custom_call.1} parent=1 // pred_check
      _
    $region7: #{tpu_custom_call.1} parent=1 // pred_check_branch
      %35 = sbr.rel (0) target = $region9
    $region8: #{tpu_custom_call.1} parent=1 // pred_region
      %s37 = ssub.s32 128, 128
      %38 = vsyncadd [#allocation6], %s37
      %s39 = sshll.u32 [#allocation5], 4
      %s40 = int_to_ptr.vmem [resolvable:$true] %s39
      %45 = dma.hbm_to_vmem [thread:$0]  %s1, 128, %s40, [#allocation6], 64, 64, 4
    $region9: #{tpu_custom_call.1} parent=1 // pred_fallthru
      _
    // Predicated region
    $region10: #{tpu_custom_call.1} parent=1 // pred_check
      _
    $region11: #{tpu_custom_call.1} parent=1 // pred_check_branch
      %47 = sbr.rel (0) target = $region13
    $region12: #{tpu_custom_call.1} parent=1 // pred_region
      %s49 = ssub.s32 128, 128
      %50 = vsyncadd [#allocation6], %s49
      %s51 = sshll.u32 [#allocation7], 4
      %s52 = int_to_ptr.vmem [resolvable:$true] %s51
      %57 = dma.hbm_to_vmem [thread:$0]  %s2, 128, %s52, [#allocation6], 64, 64, 4
    $region13: #{tpu_custom_call.1} parent=1 // pred_fallthru
      _
    // Predicated region
    $region14: #{tpu_custom_call.1} parent=1 // pred_check
      _
    $region15: #{tpu_custom_call.1} parent=1 // pred_check_branch
      %59 = sbr.rel (0) target = $region17
    $region16: #{tpu_custom_call.1} parent=1 // pred_region
      %s61 = ssub.s32 4096, 4096
      %62 = vsyncadd [#allocation9], %s61
      %s63 = sshll.u32 [#allocation8], 4
      %s64 = int_to_ptr.vmem [resolvable:$true] %s63
      %69 = dma.hbm_to_vmem [thread:$0]  %s3, 4096, %s64, [#allocation9], 256, 256, 16
    $region17: #{tpu_custom_call.1} parent=1 // pred_fallthru
      _
    // Predicated region
    $region18: #{tpu_custom_call.1} parent=1 // pred_check
      _
    $region19: #{tpu_custom_call.1} parent=1 // pred_check_branch
      %71 = sbr.rel (0) target = $region21
    $region20: #{tpu_custom_call.1} parent=1 // pred_region
      %s73 = ssub.s32 4096, 4096
      %74 = vsyncadd [#allocation9], %s73
      %s75 = sshll.u32 [#allocation10], 4
      %s76 = int_to_ptr.vmem [resolvable:$true] %s75
      %81 = dma.hbm_to_vmem [thread:$0]  %s4, 4096, %s76, [#allocation9], 256, 256, 16
    $region21: #{tpu_custom_call.1} parent=1 // pred_fallthru
      _
    // Predicated region
    $region22: #{tpu_custom_call.1} parent=1 // pred_check
      _
    $region23: #{tpu_custom_call.1} parent=1 // pred_check_branch
      %83 = sbr.rel (0) target = $region25
    $region24: #{tpu_custom_call.1} parent=1 // pred_region
      %s85 = ssub.s32 4096, 4096
      %86 = vsyncadd [#allocation12], %s85
      %s87 = sshll.u32 [#allocation11], 4
      %s88 = int_to_ptr.vmem [resolvable:$true] %s87
      %93 = dma.hbm_to_vmem [thread:$0]  %s5, 4096, %s88, [#allocation12], 256, 256, 16
    $region25: #{tpu_custom_call.1} parent=1 // pred_fallthru
      _
    // Predicated region
    $region26: #{tpu_custom_call.1} parent=1 // pred_check
      _
    $region27: #{tpu_custom_call.1} parent=1 // pred_check_branch
      %95 = sbr.rel (0) target = $region29
    $region28: #{tpu_custom_call.1} parent=1 // pred_region
      _
    $region29: #{tpu_custom_call.1} parent=1 // pred_fallthru
      _
    // Predicated region
    $region30: #{tpu_custom_call.1} parent=1 // pred_check
      _
    $region31: #{tpu_custom_call.1} parent=1 // pred_check_branch
      %97 = sbr.rel (0) target = $region33
    $region32: #{tpu_custom_call.1} parent=1 // pred_region
      %s99 = ssub.s32 8192, 8192
      %100 = vsyncadd [#allocation12], %s99
      %s101 = sshll.u32 [#allocation13], 4
      %s102 = int_to_ptr.vmem [resolvable:$true] %s101
      %107 = dma.hbm_to_vmem [thread:$0]  %s7, 8192, %s102, [#allocation12], 128, 128, 8
    $region33: #{tpu_custom_call.1} parent=1 // pred_fallthru
      _
    // Predicated region
    $region34: #{tpu_custom_call.1} parent=1 // pred_check
      _
    $region35: #{tpu_custom_call.1} parent=1 // pred_check_branch
      %109 = sbr.rel (0) target = $region37
    $region36: #{tpu_custom_call.1} parent=1 // pred_region
      _
    $region37: #{tpu_custom_call.1} parent=1 // pred_fallthru
      _
    // Predicated region
    $region38: #{tpu_custom_call.1} parent=1 // pred_check
      _
    $region39: #{tpu_custom_call.1} parent=1 // pred_check_branch
      %111 = sbr.rel (0) target = $region41
    $region40: #{tpu_custom_call.1} parent=1 // pred_region
      %s113 = ssub.s32 2048, 2048
      %114 = vsyncadd [#allocation15], %s113
      %s115 = sshll.u32 [#allocation14], 4
      %s116 = int_to_ptr.vmem [resolvable:$true] %s115
      %121 = dma.hbm_to_vmem [thread:$0]  %s9, 2048, %s116, [#allocation15], 64, 64, 4
    $region41: #{tpu_custom_call.1} parent=1 // pred_fallthru
      _
    // Predicated region
    $region42: #{tpu_custom_call.1} parent=1 // pred_check
      _
    $region43: #{tpu_custom_call.1} parent=1 // pred_check_branch
      %123 = sbr.rel (0) target = $region45
    $region44: #{tpu_custom_call.1} parent=1 // pred_region
      _
    $region45: #{tpu_custom_call.1} parent=1 // pred_fallthru
      _
    // Predicated region
    $region46: #{tpu_custom_call.1} parent=1 // pred_check
      _
    $region47: #{tpu_custom_call.1} parent=1 // pred_check_branch
      %125 = sbr.rel (0) target = $region49
    $region48: #{tpu_custom_call.1} parent=1 // pred_region
      %126 = dma.done [#allocation3], 128
    $region49: #{tpu_custom_call.1} parent=1 // pred_fallthru
      _
    // Predicated region
    $region50: #{tpu_custom_call.1} parent=1 // pred_check
      _
    $region51: #{tpu_custom_call.1} parent=1 // pred_check_branch
      %128 = sbr.rel (0) target = $region53
    $region52: #{tpu_custom_call.1} parent=1 // pred_region
      %129 = dma.done [#allocation6], 128
    $region53: #{tpu_custom_call.1} parent=1 // pred_fallthru
      _
    // Predicated region
    $region54: #{tpu_custom_call.1} parent=1 // pred_check
      _
    $region55: #{tpu_custom_call.1} parent=1 // pred_check_branch
      %131 = sbr.rel (0) target = $region57
    $region56: #{tpu_custom_call.1} parent=1 // pred_region
      %132 = dma.done [#allocation6], 128
    $region57: #{tpu_custom_call.1} parent=1 // pred_fallthru
      _
    // Predicated region
    $region58: #{tpu_custom_call.1} parent=1 // pred_check
      _
    $region59: #{tpu_custom_call.1} parent=1 // pred_check_branch
      %134 = sbr.rel (0) target = $region61
    $region60: #{tpu_custom_call.1} parent=1 // pred_region
      %135 = dma.done [#allocation9], 4096
    $region61: #{tpu_custom_call.1} parent=1 // pred_fallthru
      _
    // Predicated region
    $region62: #{tpu_custom_call.1} parent=1 // pred_check
      _
    $region63: #{tpu_custom_call.1} parent=1 // pred_check_branch
      %137 = sbr.rel (0) target = $region65
    $region64: #{tpu_custom_call.1} parent=1 // pred_region
      %138 = dma.done [#allocation9], 4096
    $region65: #{tpu_custom_call.1} parent=1 // pred_fallthru
      _
    // Predicated region
    $region66: #{tpu_custom_call.1} parent=1 // pred_check
      _
    $region67: #{tpu_custom_call.1} parent=1 // pred_check_branch
      %140 = sbr.rel (0) target = $region69
    $region68: #{tpu_custom_call.1} parent=1 // pred_region
      %141 = dma.done [#allocation12], 4096
    $region69: #{tpu_custom_call.1} parent=1 // pred_fallthru
      _
    // Predicated region
    $region70: #{tpu_custom_call.1} parent=1 // pred_check
      _
    $region71: #{tpu_custom_call.1} parent=1 // pred_check_branch
      %143 = sbr.rel (0) target = $region73
    $region72: #{tpu_custom_call.1} parent=1 // pred_region
      %144 = dma.done [#allocation12], 8192
    $region73: #{tpu_custom_call.1} parent=1 // pred_fallthru
      _
    // Predicated region
    $region74: #{tpu_custom_call.1} parent=1 // pred_check
      _
    $region75: #{tpu_custom_call.1} parent=1 // pred_check_branch
      %146 = sbr.rel (0) target = $region77
    $region76: #{tpu_custom_call.1} parent=1 // pred_region
      %147 = dma.done [#allocation15], 2048
    $region77: #{tpu_custom_call.1} parent=1 // pred_fallthru
      _
    %v149 = vld [vmem:[#allocation2] sm:$0xf]
    %v150 = vld [vmem:[#allocation2 + $0x4] sm:$0xf]
    %v151 = vld [vmem:[#allocation8] sm:$0xff]
    %v152 = vld [vmem:[#allocation8 + $0x8] sm:$0xff]
    %v153 = vld [vmem:[#allocation8 + $0x10] sm:$0xff]
    %v154 = vld [vmem:[#allocation8 + $0x18] sm:$0xff]
    %v155 = vld [vmem:[#allocation8 + $0x20] sm:$0xff]
    %v156 = vld [vmem:[#allocation8 + $0x28] sm:$0xff]
    %v157 = vld [vmem:[#allocation8 + $0x30] sm:$0xff]
    %v158 = vld [vmem:[#allocation8 + $0x38] sm:$0xff]
    %v159 = vld [vmem:[#allocation8 + $0x40] sm:$0xff]
    %v160 = vld [vmem:[#allocation8 + $0x48] sm:$0xff]
    %v161 = vld [vmem:[#allocation8 + $0x50] sm:$0xff]
    %v162 = vld [vmem:[#allocation8 + $0x58] sm:$0xff]
    %v163 = vld [vmem:[#allocation8 + $0x60] sm:$0xff]
    %v164 = vld [vmem:[#allocation8 + $0x68] sm:$0xff]
    %v165 = vld [vmem:[#allocation8 + $0x70] sm:$0xff]
    %v166 = vld [vmem:[#allocation8 + $0x78] sm:$0xff]
    %v167 = vld [vmem:[#allocation8 + $0x80] sm:$0xff]
    %v168 = vld [vmem:[#allocation8 + $0x88] sm:$0xff]
    %v169 = vld [vmem:[#allocation8 + $0x90] sm:$0xff]
    %v170 = vld [vmem:[#allocation8 + $0x98] sm:$0xff]
    %v171 = vld [vmem:[#allocation8 + $0xa0] sm:$0xff]
    %v172 = vld [vmem:[#allocation8 + $0xa8] sm:$0xff]
    %v173 = vld [vmem:[#allocation8 + $0xb0] sm:$0xff]
    %v174 = vld [vmem:[#allocation8 + $0xb8] sm:$0xff]
    %v175 = vld [vmem:[#allocation8 + $0xc0] sm:$0xff]
    %v176 = vld [vmem:[#allocation8 + $0xc8] sm:$0xff]
    %v177 = vld [vmem:[#allocation8 + $0xd0] sm:$0xff]
    %v178 = vld [vmem:[#allocation8 + $0xd8] sm:$0xff]
    %v179 = vld [vmem:[#allocation8 + $0xe0] sm:$0xff]
    %v180 = vld [vmem:[#allocation8 + $0xe8] sm:$0xff]
    %v181 = vld [vmem:[#allocation8 + $0xf0] sm:$0xff]
    %v182 = vld [vmem:[#allocation8 + $0xf8] sm:$0xff]
    %v183 = vld [vmem:[#allocation5] sm:$0xf]
    %v184 = vld [vmem:[#allocation5 + $0x4] sm:$0xf]
    %v185 = vld [vmem:[#allocation10] sm:$0xff]
    %v186 = vld [vmem:[#allocation10 + $0x8] sm:$0xff]
    %v187 = vld [vmem:[#allocation10 + $0x10] sm:$0xff]
    %v188 = vld [vmem:[#allocation10 + $0x18] sm:$0xff]
    %v189 = vld [vmem:[#allocation10 + $0x20] sm:$0xff]
    %v190 = vld [vmem:[#allocation10 + $0x28] sm:$0xff]
    %v191 = vld [vmem:[#allocation10 + $0x30] sm:$0xff]
    %v192 = vld [vmem:[#allocation10 + $0x38] sm:$0xff]
    %v193 = vld [vmem:[#allocation10 + $0x40] sm:$0xff]
    %v194 = vld [vmem:[#allocation10 + $0x48] sm:$0xff]
    %v195 = vld [vmem:[#allocation10 + $0x50] sm:$0xff]
    %v196 = vld [vmem:[#allocation10 + $0x58] sm:$0xff]
    %v197 = vld [vmem:[#allocation10 + $0x60] sm:$0xff]
    %v198 = vld [vmem:[#allocation10 + $0x68] sm:$0xff]
    %v199 = vld [vmem:[#allocation10 + $0x70] sm:$0xff]
    %v200 = vld [vmem:[#allocation10 + $0x78] sm:$0xff]
    %v201 = vld [vmem:[#allocation10 + $0x80] sm:$0xff]
    %v202 = vld [vmem:[#allocation10 + $0x88] sm:$0xff]
    %v203 = vld [vmem:[#allocation10 + $0x90] sm:$0xff]
    %v204 = vld [vmem:[#allocation10 + $0x98] sm:$0xff]
    %v205 = vld [vmem:[#allocation10 + $0xa0] sm:$0xff]
    %v206 = vld [vmem:[#allocation10 + $0xa8] sm:$0xff]
    %v207 = vld [vmem:[#allocation10 + $0xb0] sm:$0xff]
    %v208 = vld [vmem:[#allocation10 + $0xb8] sm:$0xff]
    %v209 = vld [vmem:[#allocation10 + $0xc0] sm:$0xff]
    %v210 = vld [vmem:[#allocation10 + $0xc8] sm:$0xff]
    %v211 = vld [vmem:[#allocation10 + $0xd0] sm:$0xff]
    %v212 = vld [vmem:[#allocation10 + $0xd8] sm:$0xff]
    %v213 = vld [vmem:[#allocation10 + $0xe0] sm:$0xff]
    %v214 = vld [vmem:[#allocation10 + $0xe8] sm:$0xff]
    %v215 = vld [vmem:[#allocation10 + $0xf0] sm:$0xff]
    %v216 = vld [vmem:[#allocation10 + $0xf8] sm:$0xff]
    %v219 = vunpack.c.l.b16 %v183
    %v220 = vunpack.c.l.b16 %v184
    %v221 = vpack.c.b16 %v220, %v219
    %v255 = vunpack.c.l.b16 %v185
    %v256 = vunpack.c.h.b16 %v185
    %v257 = vunpack.c.l.b16 %v186
    %v258 = vunpack.c.h.b16 %v186
    %v259 = vunpack.c.l.b16 %v187
    %v260 = vunpack.c.h.b16 %v187
    %v261 = vunpack.c.l.b16 %v188
    %v262 = vunpack.c.h.b16 %v188
    %v263 = vunpack.c.l.b16 %v189
    %v264 = vunpack.c.h.b16 %v189
    %v265 = vunpack.c.l.b16 %v190
    %v266 = vunpack.c.h.b16 %v190
    %v267 = vunpack.c.l.b16 %v191
    %v268 = vunpack.c.h.b16 %v191
    %v269 = vunpack.c.l.b16 %v192
    %v270 = vunpack.c.h.b16 %v192
    %v271 = vunpack.c.l.b16 %v193
    %v272 = vunpack.c.h.b16 %v193
    %v273 = vunpack.c.l.b16 %v194
    %v274 = vunpack.c.h.b16 %v194
    %v275 = vunpack.c.l.b16 %v195
    %v276 = vunpack.c.h.b16 %v195
    %v277 = vunpack.c.l.b16 %v196
    %v278 = vunpack.c.h.b16 %v196
    %v279 = vunpack.c.l.b16 %v197
    %v280 = vunpack.c.h.b16 %v197
    %v281 = vunpack.c.l.b16 %v198
    %v282 = vunpack.c.h.b16 %v198
    %v283 = vunpack.c.l.b16 %v199
    %v284 = vunpack.c.h.b16 %v199
    %v285 = vunpack.c.l.b16 %v200
    %v286 = vunpack.c.h.b16 %v200
    %v287 = vunpack.c.l.b16 %v201
    %v288 = vunpack.c.h.b16 %v201
    %v289 = vunpack.c.l.b16 %v202
    %v290 = vunpack.c.h.b16 %v202
    %v291 = vunpack.c.l.b16 %v203
    %v292 = vunpack.c.h.b16 %v203
    %v293 = vunpack.c.l.b16 %v204
    %v294 = vunpack.c.h.b16 %v204
    %v295 = vunpack.c.l.b16 %v205
    %v296 = vunpack.c.h.b16 %v205
    %v297 = vunpack.c.l.b16 %v206
    %v298 = vunpack.c.h.b16 %v206
    %v299 = vunpack.c.l.b16 %v207
    %v300 = vunpack.c.h.b16 %v207
    %v301 = vunpack.c.l.b16 %v208
    %v302 = vunpack.c.h.b16 %v208
    %v303 = vunpack.c.l.b16 %v209
    %v304 = vunpack.c.h.b16 %v209
    %v305 = vunpack.c.l.b16 %v210
    %v306 = vunpack.c.h.b16 %v210
    %v307 = vunpack.c.l.b16 %v211
    %v308 = vunpack.c.h.b16 %v211
    %v309 = vunpack.c.l.b16 %v212
    %v310 = vunpack.c.h.b16 %v212
    %v311 = vunpack.c.l.b16 %v213
    %v312 = vunpack.c.h.b16 %v213
    %v313 = vunpack.c.l.b16 %v214
    %v314 = vunpack.c.h.b16 %v214
    %v315 = vunpack.c.l.b16 %v215
    %v316 = vunpack.c.h.b16 %v215
    %v317 = vunpack.c.l.b16 %v216
    %v318 = vunpack.c.h.b16 %v216
    %v319 = vpack.c.b16 %v259, %v255
    %v320 = vpack.c.b16 %v260, %v256
    %v321 = vpack.c.b16 %v261, %v257
    %v322 = vpack.c.b16 %v262, %v258
    %v323 = vpack.c.b16 %v267, %v263
    %v324 = vpack.c.b16 %v268, %v264
    %v325 = vpack.c.b16 %v269, %v265
    %v326 = vpack.c.b16 %v270, %v266
    %v327 = vpack.c.b16 %v275, %v271
    %v328 = vpack.c.b16 %v276, %v272
    %v329 = vpack.c.b16 %v277, %v273
    %v330 = vpack.c.b16 %v278, %v274
    %v331 = vpack.c.b16 %v283, %v279
    %v332 = vpack.c.b16 %v284, %v280
    %v333 = vpack.c.b16 %v285, %v281
    %v334 = vpack.c.b16 %v286, %v282
    %v335 = vpack.c.b16 %v291, %v287
    %v336 = vpack.c.b16 %v292, %v288
    %v337 = vpack.c.b16 %v293, %v289
    %v338 = vpack.c.b16 %v294, %v290
    %v339 = vpack.c.b16 %v299, %v295
    %v340 = vpack.c.b16 %v300, %v296
    %v341 = vpack.c.b16 %v301, %v297
    %v342 = vpack.c.b16 %v302, %v298
    %v343 = vpack.c.b16 %v307, %v303
    %v344 = vpack.c.b16 %v308, %v304
    %v345 = vpack.c.b16 %v309, %v305
    %v346 = vpack.c.b16 %v310, %v306
    %v347 = vpack.c.b16 %v315, %v311
    %v348 = vpack.c.b16 %v316, %v312
    %v349 = vpack.c.b16 %v317, %v313
    %v350 = vpack.c.b16 %v318, %v314
    %383 = vmatprep.subr.bf16.mxu0 %v348
    %384 = vmatpush1.bf16.msra.mxu0 %v347
    %385 = vmatprep.subr.bf16.mxu0 %v344
    %386 = vmatpush1.bf16.msra.mxu0 %v343
    %387 = vmatprep.subr.bf16.mxu0 %v340
    %388 = vmatpush1.bf16.msra.mxu0 %v339
    %389 = vmatprep.subr.bf16.mxu0 %v336
    %390 = vmatpush1.bf16.msra.mxu0 %v335
    %391 = vmatprep.subr.bf16.mxu0 %v332
    %392 = vmatpush1.bf16.msra.mxu0 %v331
    %393 = vmatprep.subr.bf16.mxu0 %v328
    %394 = vmatpush1.bf16.msra.mxu0 %v327
    %395 = vmatprep.subr.bf16.mxu0 %v324
    %396 = vmatpush1.bf16.msra.mxu0 %v323
    %397 = vmatprep.subr.bf16.mxu0 %v320
    %398 = vmatpush1.bf16.msra.mxu0 %v319
    %399 = vmatprep.subr.bf16.mxu0 0
    %400 = vmatpush2.bf16.msra.mxu0 0
    %401 = vmatprep.subr.bf16.mxu0 0
    %402 = vmatpush2.bf16.msra.mxu0 0
    %403 = vmatprep.subr.bf16.mxu0 0
    %404 = vmatpush2.bf16.msra.mxu0 0
    %405 = vmatprep.subr.bf16.mxu0 0
    %406 = vmatpush2.bf16.msra.mxu0 0
    %407 = vmatprep.subr.bf16.mxu0 0
    %408 = vmatpush2.bf16.msra.mxu0 0
    %409 = vmatprep.subr.bf16.mxu0 0
    %410 = vmatpush2.bf16.msra.mxu0 0
    %411 = vmatprep.subr.bf16.mxu0 0
    %412 = vmatpush2.bf16.msra.mxu0 0
    %413 = vmatprep.subr.bf16.mxu0 0
    %414 = vmatpush2.bf16.msra.mxu0 0
    %415 = vmatprep.mubr.bf16.mxu0 0
    %416 = vmatmul.mubr.bf16.gmra.mxu0 %v221
    %v417 = vpop.f32.mrf.mxu0
    %v418 = vadd.f32 0.0, %v417
    %v419 = vpop.f32.mrf.mxu0
    %v420 = vadd.f32 0.0, %v419
    %v421 = vpop.f32.mrf.mxu0
    %v422 = vadd.f32 0.0, %v421
    %v423 = vpop.f32.mrf.mxu0
    %v424 = vadd.f32 0.0, %v423
    %425 = vdwg.mxu0
    %426 = vmatprep.subr.bf16.mxu0 %v350
    %427 = vmatpush1.bf16.msra.mxu0 %v349
    %428 = vmatprep.subr.bf16.mxu0 %v346
    %429 = vmatpush1.bf16.msra.mxu0 %v345
    %430 = vmatprep.subr.bf16.mxu0 %v342
    %431 = vmatpush1.bf16.msra.mxu0 %v341
    %432 = vmatprep.subr.bf16.mxu0 %v338
    %433 = vmatpush1.bf16.msra.mxu0 %v337
    %434 = vmatprep.subr.bf16.mxu0 %v334
    %435 = vmatpush1.bf16.msra.mxu0 %v333
    %436 = vmatprep.subr.bf16.mxu0 %v330
    %437 = vmatpush1.bf16.msra.mxu0 %v329
    %438 = vmatprep.subr.bf16.mxu0 %v326
    %439 = vmatpush1.bf16.msra.mxu0 %v325
    %440 = vmatprep.subr.bf16.mxu0 %v322
    %441 = vmatpush1.bf16.msra.mxu0 %v321
    %442 = vmatprep.subr.bf16.mxu0 0
    %443 = vmatpush2.bf16.msra.mxu0 0
    %444 = vmatprep.subr.bf16.mxu0 0
    %445 = vmatpush2.bf16.msra.mxu0 0
    %446 = vmatprep.subr.bf16.mxu0 0
    %447 = vmatpush2.bf16.msra.mxu0 0
    %448 = vmatprep.subr.bf16.mxu0 0
    %449 = vmatpush2.bf16.msra.mxu0 0
    %450 = vmatprep.subr.bf16.mxu0 0
    %451 = vmatpush2.bf16.msra.mxu0 0
    %452 = vmatprep.subr.bf16.mxu0 0
    %453 = vmatpush2.bf16.msra.mxu0 0
    %454 = vmatprep.subr.bf16.mxu0 0
    %455 = vmatpush2.bf16.msra.mxu0 0
    %456 = vmatprep.subr.bf16.mxu0 0
    %457 = vmatpush2.bf16.msra.mxu0 0
    %458 = vmatprep.mubr.bf16.mxu0 0
    %459 = vmatmul.mubr.bf16.gmra.mxu0 %v221
    %v460 = vpop.f32.mrf.mxu0
    %v461 = vadd.f32 0.0, %v460
    %v462 = vpop.f32.mrf.mxu0
    %v463 = vadd.f32 0.0, %v462
    %v464 = vpop.f32.mrf.mxu0
    %v465 = vadd.f32 0.0, %v464
    %v466 = vpop.f32.mrf.mxu0
    %v467 = vadd.f32 0.0, %v466
    %468 = vdwg.mxu0
    %v471 = vunpack.c.l.b16 %v149
    %v472 = vunpack.c.l.b16 %v150
    %v473 = vpack.c.b16 %v472, %v471
    %v507 = vunpack.c.l.b16 %v151
    %v508 = vunpack.c.h.b16 %v151
    %v509 = vunpack.c.l.b16 %v152
    %v510 = vunpack.c.h.b16 %v152
    %v511 = vunpack.c.l.b16 %v153
    %v512 = vunpack.c.h.b16 %v153
    %v513 = vunpack.c.l.b16 %v154
    %v514 = vunpack.c.h.b16 %v154
    %v515 = vunpack.c.l.b16 %v155
    %v516 = vunpack.c.h.b16 %v155
    %v517 = vunpack.c.l.b16 %v156
    %v518 = vunpack.c.h.b16 %v156
    %v519 = vunpack.c.l.b16 %v157
    %v520 = vunpack.c.h.b16 %v157
    %v521 = vunpack.c.l.b16 %v158
    %v522 = vunpack.c.h.b16 %v158
    %v523 = vunpack.c.l.b16 %v159
    %v524 = vunpack.c.h.b16 %v159
    %v525 = vunpack.c.l.b16 %v160
    %v526 = vunpack.c.h.b16 %v160
    %v527 = vunpack.c.l.b16 %v161
    %v528 = vunpack.c.h.b16 %v161
    %v529 = vunpack.c.l.b16 %v162
    %v530 = vunpack.c.h.b16 %v162
    %v531 = vunpack.c.l.b16 %v163
    %v532 = vunpack.c.h.b16 %v163
    %v533 = vunpack.c.l.b16 %v164
    %v534 = vunpack.c.h.b16 %v164
    %v535 = vunpack.c.l.b16 %v165
    %v536 = vunpack.c.h.b16 %v165
    %v537 = vunpack.c.l.b16 %v166
    %v538 = vunpack.c.h.b16 %v166
    %v539 = vunpack.c.l.b16 %v167
    %v540 = vunpack.c.h.b16 %v167
    %v541 = vunpack.c.l.b16 %v168
    %v542 = vunpack.c.h.b16 %v168
    %v543 = vunpack.c.l.b16 %v169
    %v544 = vunpack.c.h.b16 %v169
    %v545 = vunpack.c.l.b16 %v170
    %v546 = vunpack.c.h.b16 %v170
    %v547 = vunpack.c.l.b16 %v171
    %v548 = vunpack.c.h.b16 %v171
    %v549 = vunpack.c.l.b16 %v172
    %v550 = vunpack.c.h.b16 %v172
    %v551 = vunpack.c.l.b16 %v173
    %v552 = vunpack.c.h.b16 %v173
    %v553 = vunpack.c.l.b16 %v174
    %v554 = vunpack.c.h.b16 %v174
    %v555 = vunpack.c.l.b16 %v175
    %v556 = vunpack.c.h.b16 %v175
    %v557 = vunpack.c.l.b16 %v176
    %v558 = vunpack.c.h.b16 %v176
    %v559 = vunpack.c.l.b16 %v177
    %v560 = vunpack.c.h.b16 %v177
    %v561 = vunpack.c.l.b16 %v178
    %v562 = vunpack.c.h.b16 %v178
    %v563 = vunpack.c.l.b16 %v179
    %v564 = vunpack.c.h.b16 %v179
    %v565 = vunpack.c.l.b16 %v180
    %v566 = vunpack.c.h.b16 %v180
    %v567 = vunpack.c.l.b16 %v181
    %v568 = vunpack.c.h.b16 %v181
    %v569 = vunpack.c.l.b16 %v182
    %v570 = vunpack.c.h.b16 %v182
    %v571 = vpack.c.b16 %v511, %v507
    %v572 = vpack.c.b16 %v512, %v508
    %v573 = vpack.c.b16 %v513, %v509
    %v574 = vpack.c.b16 %v514, %v510
    %v575 = vpack.c.b16 %v519, %v515
    %v576 = vpack.c.b16 %v520, %v516
    %v577 = vpack.c.b16 %v521, %v517
    %v578 = vpack.c.b16 %v522, %v518
    %v579 = vpack.c.b16 %v527, %v523
    %v580 = vpack.c.b16 %v528, %v524
    %v581 = vpack.c.b16 %v529, %v525
    %v582 = vpack.c.b16 %v530, %v526
    %v583 = vpack.c.b16 %v535, %v531
    %v584 = vpack.c.b16 %v536, %v532
    %v585 = vpack.c.b16 %v537, %v533
    %v586 = vpack.c.b16 %v538, %v534
    %v587 = vpack.c.b16 %v543, %v539
    %v588 = vpack.c.b16 %v544, %v540
    %v589 = vpack.c.b16 %v545, %v541
    %v590 = vpack.c.b16 %v546, %v542
    %v591 = vpack.c.b16 %v551, %v547
    %v592 = vpack.c.b16 %v552, %v548
    %v593 = vpack.c.b16 %v553, %v549
    %v594 = vpack.c.b16 %v554, %v550
    %v595 = vpack.c.b16 %v559, %v555
    %v596 = vpack.c.b16 %v560, %v556
    %v597 = vpack.c.b16 %v561, %v557
    %v598 = vpack.c.b16 %v562, %v558
    %v599 = vpack.c.b16 %v567, %v563
    %v600 = vpack.c.b16 %v568, %v564
    %v601 = vpack.c.b16 %v569, %v565
    %v602 = vpack.c.b16 %v570, %v566
    %635 = vmatprep.subr.bf16.mxu0 %v600
    %636 = vmatpush1.bf16.msra.mxu0 %v599
    %637 = vmatprep.subr.bf16.mxu0 %v596
    %638 = vmatpush1.bf16.msra.mxu0 %v595
    %639 = vmatprep.subr.bf16.mxu0 %v592
    %640 = vmatpush1.bf16.msra.mxu0 %v591
    %641 = vmatprep.subr.bf16.mxu0 %v588
    %642 = vmatpush1.bf16.msra.mxu0 %v587
    %643 = vmatprep.subr.bf16.mxu0 %v584
    %644 = vmatpush1.bf16.msra.mxu0 %v583
    %645 = vmatprep.subr.bf16.mxu0 %v580
    %646 = vmatpush1.bf16.msra.mxu0 %v579
    %647 = vmatprep.subr.bf16.mxu0 %v576
    %648 = vmatpush1.bf16.msra.mxu0 %v575
    %649 = vmatprep.subr.bf16.mxu0 %v572
    %650 = vmatpush1.bf16.msra.mxu0 %v571
    %651 = vmatprep.subr.bf16.mxu0 0
    %652 = vmatpush2.bf16.msra.mxu0 0
    %653 = vmatprep.subr.bf16.mxu0 0
    %654 = vmatpush2.bf16.msra.mxu0 0
    %655 = vmatprep.subr.bf16.mxu0 0
    %656 = vmatpush2.bf16.msra.mxu0 0
    %657 = vmatprep.subr.bf16.mxu0 0
    %658 = vmatpush2.bf16.msra.mxu0 0
    %659 = vmatprep.subr.bf16.mxu0 0
    %660 = vmatpush2.bf16.msra.mxu0 0
    %661 = vmatprep.subr.bf16.mxu0 0
    %662 = vmatpush2.bf16.msra.mxu0 0
    %663 = vmatprep.subr.bf16.mxu0 0
    %664 = vmatpush2.bf16.msra.mxu0 0
    %665 = vmatprep.subr.bf16.mxu0 0
    %666 = vmatpush2.bf16.msra.mxu0 0
    %667 = vmatprep.mubr.bf16.mxu0 0
    %668 = vmatmul.mubr.bf16.gmra.mxu0 %v473
    %v669 = vpop.f32.mrf.mxu0
    %v670 = vadd.f32 %v418, %v669
    %v671 = vpop.f32.mrf.mxu0
    %v672 = vadd.f32 %v420, %v671
    %v673 = vpop.f32.mrf.mxu0
    %v674 = vadd.f32 %v422, %v673
    %v675 = vpop.f32.mrf.mxu0
    %v676 = vadd.f32 %v424, %v675
    %677 = vdwg.mxu0
    %678 = vmatprep.subr.bf16.mxu0 %v602
    %679 = vmatpush1.bf16.msra.mxu0 %v601
    %680 = vmatprep.subr.bf16.mxu0 %v598
    %681 = vmatpush1.bf16.msra.mxu0 %v597
    %682 = vmatprep.subr.bf16.mxu0 %v594
    %683 = vmatpush1.bf16.msra.mxu0 %v593
    %684 = vmatprep.subr.bf16.mxu0 %v590
    %685 = vmatpush1.bf16.msra.mxu0 %v589
    %686 = vmatprep.subr.bf16.mxu0 %v586
    %687 = vmatpush1.bf16.msra.mxu0 %v585
    %688 = vmatprep.subr.bf16.mxu0 %v582
    %689 = vmatpush1.bf16.msra.mxu0 %v581
    %690 = vmatprep.subr.bf16.mxu0 %v578
    %691 = vmatpush1.bf16.msra.mxu0 %v577
    %692 = vmatprep.subr.bf16.mxu0 %v574
    %693 = vmatpush1.bf16.msra.mxu0 %v573
    %694 = vmatprep.subr.bf16.mxu0 0
    %695 = vmatpush2.bf16.msra.mxu0 0
    %696 = vmatprep.subr.bf16.mxu0 0
    %697 = vmatpush2.bf16.msra.mxu0 0
    %698 = vmatprep.subr.bf16.mxu0 0
    %699 = vmatpush2.bf16.msra.mxu0 0
    %700 = vmatprep.subr.bf16.mxu0 0
    %701 = vmatpush2.bf16.msra.mxu0 0
    %702 = vmatprep.subr.bf16.mxu0 0
    %703 = vmatpush2.bf16.msra.mxu0 0
    %704 = vmatprep.subr.bf16.mxu0 0
    %705 = vmatpush2.bf16.msra.mxu0 0
    %706 = vmatprep.subr.bf16.mxu0 0
    %707 = vmatpush2.bf16.msra.mxu0 0
    %708 = vmatprep.subr.bf16.mxu0 0
    %709 = vmatpush2.bf16.msra.mxu0 0
    %710 = vmatprep.mubr.bf16.mxu0 0
    %711 = vmatmul.mubr.bf16.gmra.mxu0 %v473
    %v712 = vpop.f32.mrf.mxu0
    %v713 = vadd.f32 %v461, %v712
    %v714 = vpop.f32.mrf.mxu0
    %v715 = vadd.f32 %v463, %v714
    %v716 = vpop.f32.mrf.mxu0
    %v717 = vadd.f32 %v465, %v716
    %v718 = vpop.f32.mrf.mxu0
    %v719 = vadd.f32 %v467, %v718
    %720 = vdwg.mxu0
    %v721 = vld [vmem:[#allocation7] sm:$0xf]
    %v722 = vld [vmem:[#allocation7 + $0x4] sm:$0xf]
    %v723 = vld [vmem:[#allocation11] sm:$0xff]
    %v724 = vld [vmem:[#allocation11 + $0x8] sm:$0xff]
    %v725 = vld [vmem:[#allocation11 + $0x10] sm:$0xff]
    %v726 = vld [vmem:[#allocation11 + $0x18] sm:$0xff]
    %v727 = vld [vmem:[#allocation11 + $0x20] sm:$0xff]
    %v728 = vld [vmem:[#allocation11 + $0x28] sm:$0xff]
    %v729 = vld [vmem:[#allocation11 + $0x30] sm:$0xff]
    %v730 = vld [vmem:[#allocation11 + $0x38] sm:$0xff]
    %v731 = vld [vmem:[#allocation11 + $0x40] sm:$0xff]
    %v732 = vld [vmem:[#allocation11 + $0x48] sm:$0xff]
    %v733 = vld [vmem:[#allocation11 + $0x50] sm:$0xff]
    %v734 = vld [vmem:[#allocation11 + $0x58] sm:$0xff]
    %v735 = vld [vmem:[#allocation11 + $0x60] sm:$0xff]
    %v736 = vld [vmem:[#allocation11 + $0x68] sm:$0xff]
    %v737 = vld [vmem:[#allocation11 + $0x70] sm:$0xff]
    %v738 = vld [vmem:[#allocation11 + $0x78] sm:$0xff]
    %v739 = vld [vmem:[#allocation11 + $0x80] sm:$0xff]
    %v740 = vld [vmem:[#allocation11 + $0x88] sm:$0xff]
    %v741 = vld [vmem:[#allocation11 + $0x90] sm:$0xff]
    %v742 = vld [vmem:[#allocation11 + $0x98] sm:$0xff]
    %v743 = vld [vmem:[#allocation11 + $0xa0] sm:$0xff]
    %v744 = vld [vmem:[#allocation11 + $0xa8] sm:$0xff]
    %v745 = vld [vmem:[#allocation11 + $0xb0] sm:$0xff]
    %v746 = vld [vmem:[#allocation11 + $0xb8] sm:$0xff]
    %v747 = vld [vmem:[#allocation11 + $0xc0] sm:$0xff]
    %v748 = vld [vmem:[#allocation11 + $0xc8] sm:$0xff]
    %v749 = vld [vmem:[#allocation11 + $0xd0] sm:$0xff]
    %v750 = vld [vmem:[#allocation11 + $0xd8] sm:$0xff]
    %v751 = vld [vmem:[#allocation11 + $0xe0] sm:$0xff]
    %v752 = vld [vmem:[#allocation11 + $0xe8] sm:$0xff]
    %v753 = vld [vmem:[#allocation11 + $0xf0] sm:$0xff]
    %v754 = vld [vmem:[#allocation11 + $0xf8] sm:$0xff]
    %v757 = vunpack.c.l.b16 %v721
    %v758 = vunpack.c.l.b16 %v722
    %v759 = vpack.c.b16 %v758, %v757
    %v793 = vunpack.c.l.b16 %v723
    %v794 = vunpack.c.h.b16 %v723
    %v795 = vunpack.c.l.b16 %v724
    %v796 = vunpack.c.h.b16 %v724
    %v797 = vunpack.c.l.b16 %v725
    %v798 = vunpack.c.h.b16 %v725
    %v799 = vunpack.c.l.b16 %v726
    %v800 = vunpack.c.h.b16 %v726
    %v801 = vunpack.c.l.b16 %v727
    %v802 = vunpack.c.h.b16 %v727
    %v803 = vunpack.c.l.b16 %v728
    %v804 = vunpack.c.h.b16 %v728
    %v805 = vunpack.c.l.b16 %v729
    %v806 = vunpack.c.h.b16 %v729
    %v807 = vunpack.c.l.b16 %v730
    %v808 = vunpack.c.h.b16 %v730
    %v809 = vunpack.c.l.b16 %v731
    %v810 = vunpack.c.h.b16 %v731
    %v811 = vunpack.c.l.b16 %v732
    %v812 = vunpack.c.h.b16 %v732
    %v813 = vunpack.c.l.b16 %v733
    %v814 = vunpack.c.h.b16 %v733
    %v815 = vunpack.c.l.b16 %v734
    %v816 = vunpack.c.h.b16 %v734
    %v817 = vunpack.c.l.b16 %v735
    %v818 = vunpack.c.h.b16 %v735
    %v819 = vunpack.c.l.b16 %v736
    %v820 = vunpack.c.h.b16 %v736
    %v821 = vunpack.c.l.b16 %v737
    %v822 = vunpack.c.h.b16 %v737
    %v823 = vunpack.c.l.b16 %v738
    %v824 = vunpack.c.h.b16 %v738
    %v825 = vunpack.c.l.b16 %v739
    %v826 = vunpack.c.h.b16 %v739
    %v827 = vunpack.c.l.b16 %v740
    %v828 = vunpack.c.h.b16 %v740
    %v829 = vunpack.c.l.b16 %v741
    %v830 = vunpack.c.h.b16 %v741
    %v831 = vunpack.c.l.b16 %v742
    %v832 = vunpack.c.h.b16 %v742
    %v833 = vunpack.c.l.b16 %v743
    %v834 = vunpack.c.h.b16 %v743
    %v835 = vunpack.c.l.b16 %v744
    %v836 = vunpack.c.h.b16 %v744
    %v837 = vunpack.c.l.b16 %v745
    %v838 = vunpack.c.h.b16 %v745
    %v839 = vunpack.c.l.b16 %v746
    %v840 = vunpack.c.h.b16 %v746
    %v841 = vunpack.c.l.b16 %v747
    %v842 = vunpack.c.h.b16 %v747
    %v843 = vunpack.c.l.b16 %v748
    %v844 = vunpack.c.h.b16 %v748
    %v845 = vunpack.c.l.b16 %v749
    %v846 = vunpack.c.h.b16 %v749
    %v847 = vunpack.c.l.b16 %v750
    %v848 = vunpack.c.h.b16 %v750
    %v849 = vunpack.c.l.b16 %v751
    %v850 = vunpack.c.h.b16 %v751
    %v851 = vunpack.c.l.b16 %v752
    %v852 = vunpack.c.h.b16 %v752
    %v853 = vunpack.c.l.b16 %v753
    %v854 = vunpack.c.h.b16 %v753
    %v855 = vunpack.c.l.b16 %v754
    %v856 = vunpack.c.h.b16 %v754
    %v857 = vpack.c.b16 %v797, %v793
    %v858 = vpack.c.b16 %v798, %v794
    %v859 = vpack.c.b16 %v799, %v795
    %v860 = vpack.c.b16 %v800, %v796
    %v861 = vpack.c.b16 %v805, %v801
    %v862 = vpack.c.b16 %v806, %v802
    %v863 = vpack.c.b16 %v807, %v803
    %v864 = vpack.c.b16 %v808, %v804
    %v865 = vpack.c.b16 %v813, %v809
    %v866 = vpack.c.b16 %v814, %v810
    %v867 = vpack.c.b16 %v815, %v811
    %v868 = vpack.c.b16 %v816, %v812
    %v869 = vpack.c.b16 %v821, %v817
    %v870 = vpack.c.b16 %v822, %v818
    %v871 = vpack.c.b16 %v823, %v819
    %v872 = vpack.c.b16 %v824, %v820
    %v873 = vpack.c.b16 %v829, %v825
    %v874 = vpack.c.b16 %v830, %v826
    %v875 = vpack.c.b16 %v831, %v827
    %v876 = vpack.c.b16 %v832, %v828
    %v877 = vpack.c.b16 %v837, %v833
    %v878 = vpack.c.b16 %v838, %v834
    %v879 = vpack.c.b16 %v839, %v835
    %v880 = vpack.c.b16 %v840, %v836
    %v881 = vpack.c.b16 %v845, %v841
    %v882 = vpack.c.b16 %v846, %v842
    %v883 = vpack.c.b16 %v847, %v843
    %v884 = vpack.c.b16 %v848, %v844
    %v885 = vpack.c.b16 %v853, %v849
    %v886 = vpack.c.b16 %v854, %v850
    %v887 = vpack.c.b16 %v855, %v851
    %v888 = vpack.c.b16 %v856, %v852
    %921 = vmatprep.subr.bf16.mxu0 %v886
    %922 = vmatpush1.bf16.msra.mxu0 %v885
    %923 = vmatprep.subr.bf16.mxu0 %v882
    %924 = vmatpush1.bf16.msra.mxu0 %v881
    %925 = vmatprep.subr.bf16.mxu0 %v878
    %926 = vmatpush1.bf16.msra.mxu0 %v877
    %927 = vmatprep.subr.bf16.mxu0 %v874
    %928 = vmatpush1.bf16.msra.mxu0 %v873
    %929 = vmatprep.subr.bf16.mxu0 %v870
    %930 = vmatpush1.bf16.msra.mxu0 %v869
    %931 = vmatprep.subr.bf16.mxu0 %v866
    %932 = vmatpush1.bf16.msra.mxu0 %v865
    %933 = vmatprep.subr.bf16.mxu0 %v862
    %934 = vmatpush1.bf16.msra.mxu0 %v861
    %935 = vmatprep.subr.bf16.mxu0 %v858
    %936 = vmatpush1.bf16.msra.mxu0 %v857
    %937 = vmatprep.subr.bf16.mxu0 0
    %938 = vmatpush2.bf16.msra.mxu0 0
    %939 = vmatprep.subr.bf16.mxu0 0
    %940 = vmatpush2.bf16.msra.mxu0 0
    %941 = vmatprep.subr.bf16.mxu0 0
    %942 = vmatpush2.bf16.msra.mxu0 0
    %943 = vmatprep.subr.bf16.mxu0 0
    %944 = vmatpush2.bf16.msra.mxu0 0
    %945 = vmatprep.subr.bf16.mxu0 0
    %946 = vmatpush2.bf16.msra.mxu0 0
    %947 = vmatprep.subr.bf16.mxu0 0
    %948 = vmatpush2.bf16.msra.mxu0 0
    %949 = vmatprep.subr.bf16.mxu0 0
    %950 = vmatpush2.bf16.msra.mxu0 0
    %951 = vmatprep.subr.bf16.mxu0 0
    %952 = vmatpush2.bf16.msra.mxu0 0
    %953 = vmatprep.mubr.bf16.mxu0 0
    %954 = vmatmul.mubr.bf16.gmra.mxu0 %v759
    %v955 = vpop.f32.mrf.mxu0
    %v956 = vadd.f32 0.0, %v955
    %v957 = vpop.f32.mrf.mxu0
    %v958 = vadd.f32 0.0, %v957
    %v959 = vpop.f32.mrf.mxu0
    %v960 = vadd.f32 0.0, %v959
    %v961 = vpop.f32.mrf.mxu0
    %v962 = vadd.f32 0.0, %v961
    %963 = vdwg.mxu0
    %964 = vmatprep.subr.bf16.mxu0 %v888
    %965 = vmatpush1.bf16.msra.mxu0 %v887
    %966 = vmatprep.subr.bf16.mxu0 %v884
    %967 = vmatpush1.bf16.msra.mxu0 %v883
    %968 = vmatprep.subr.bf16.mxu0 %v880
    %969 = vmatpush1.bf16.msra.mxu0 %v879
    %970 = vmatprep.subr.bf16.mxu0 %v876
    %971 = vmatpush1.bf16.msra.mxu0 %v875
    %972 = vmatprep.subr.bf16.mxu0 %v872
    %973 = vmatpush1.bf16.msra.mxu0 %v871
    %974 = vmatprep.subr.bf16.mxu0 %v868
    %975 = vmatpush1.bf16.msra.mxu0 %v867
    %976 = vmatprep.subr.bf16.mxu0 %v864
    %977 = vmatpush1.bf16.msra.mxu0 %v863
    %978 = vmatprep.subr.bf16.mxu0 %v860
    %979 = vmatpush1.bf16.msra.mxu0 %v859
    %980 = vmatprep.subr.bf16.mxu0 0
    %981 = vmatpush2.bf16.msra.mxu0 0
    %982 = vmatprep.subr.bf16.mxu0 0
    %983 = vmatpush2.bf16.msra.mxu0 0
    %984 = vmatprep.subr.bf16.mxu0 0
    %985 = vmatpush2.bf16.msra.mxu0 0
    %986 = vmatprep.subr.bf16.mxu0 0
    %987 = vmatpush2.bf16.msra.mxu0 0
    %988 = vmatprep.subr.bf16.mxu0 0
    %989 = vmatpush2.bf16.msra.mxu0 0
    %990 = vmatprep.subr.bf16.mxu0 0
    %991 = vmatpush2.bf16.msra.mxu0 0
    %992 = vmatprep.subr.bf16.mxu0 0
    %993 = vmatpush2.bf16.msra.mxu0 0
    %994 = vmatprep.subr.bf16.mxu0 0
    %995 = vmatpush2.bf16.msra.mxu0 0
    %996 = vmatprep.mubr.bf16.mxu0 0
    %997 = vmatmul.mubr.bf16.gmra.mxu0 %v759
    %v998 = vpop.f32.mrf.mxu0
    %v999 = vadd.f32 0.0, %v998
    %v1000 = vpop.f32.mrf.mxu0
    %v1001 = vadd.f32 0.0, %v1000
    %v1002 = vpop.f32.mrf.mxu0
    %v1003 = vadd.f32 0.0, %v1002
    %v1004 = vpop.f32.mrf.mxu0
    %v1005 = vadd.f32 0.0, %v1004
    %1006 = vdwg.mxu0
    %v1007 = vadd.f32 %v670, %v956
    %v1008 = vadd.f32 %v672, %v958
    %v1009 = vadd.f32 %v713, %v999
    %v1010 = vadd.f32 %v715, %v1001
    %v1011 = vadd.f32 %v674, %v960
    %v1012 = vadd.f32 %v676, %v962
    %v1013 = vadd.f32 %v717, %v1003
    %v1014 = vadd.f32 %v719, %v1005
    %v1015 = vld [vmem:[%s6] sm:$0xf]
    %v1017 = vlaneseq
    %v1018 = vshrl.u32 %v1017, 7
    %v1019 = vsub.s32 0, %v1018
    %v1020 = vrot.slane %v1015, %v1019
    %v1021 = vlaneseq
    %v1022 = vshrl.u32 %v1021, 7
    %v1023 = vsub.s32 1, %v1022
    %v1024 = vrot.slane %v1015, %v1023
    %v1025 = vlaneseq
    %v1026 = vshrl.u32 %v1025, 7
    %v1027 = vsub.s32 2, %v1026
    %v1028 = vrot.slane %v1015, %v1027
    %v1029 = vlaneseq
    %v1030 = vshrl.u32 %v1029, 7
    %v1031 = vsub.s32 3, %v1030
    %v1032 = vrot.slane %v1015, %v1031
    %v1037 = vadd.f32 %v1007, %v1020
    %v1038 = vadd.f32 %v1008, %v1024
    %v1039 = vadd.f32 %v1009, %v1028
    %v1040 = vadd.f32 %v1010, %v1032
    %v1041 = vadd.f32 %v1011, %v1020
    %v1042 = vadd.f32 %v1012, %v1024
    %v1043 = vadd.f32 %v1013, %v1028
    %v1044 = vadd.f32 %v1014, %v1032
    %v1045 = vmax.f32 %v1037, 0.0
    %v1046 = vmax.f32 %v1038, 0.0
    %v1047 = vmax.f32 %v1039, 0.0
    %v1048 = vmax.f32 %v1040, 0.0
    %v1049 = vmax.f32 %v1041, 0.0
    %v1050 = vmax.f32 %v1042, 0.0
    %v1051 = vmax.f32 %v1043, 0.0
    %v1052 = vmax.f32 %v1044, 0.0
    %v1053 = vpack.c.bf16 %v1049, %v1045
    %v1054 = vpack.c.bf16 %v1050, %v1046
    %v1055 = vpack.c.bf16 %v1051, %v1047
    %v1056 = vpack.c.bf16 %v1052, %v1048
    %v1057 = vld [vmem:[#allocation13] sm:$0xff]
    %v1058 = vld [vmem:[#allocation13 + $0x8] sm:$0xff]
    %v1059 = vld [vmem:[#allocation13 + $0x10] sm:$0xff]
    %v1060 = vld [vmem:[#allocation13 + $0x18] sm:$0xff]
    %v1061 = vld [vmem:[#allocation13 + $0x20] sm:$0xff]
    %v1062 = vld [vmem:[#allocation13 + $0x28] sm:$0xff]
    %v1063 = vld [vmem:[#allocation13 + $0x30] sm:$0xff]
    %v1064 = vld [vmem:[#allocation13 + $0x38] sm:$0xff]
    %v1065 = vld [vmem:[#allocation13 + $0x40] sm:$0xff]
    %v1066 = vld [vmem:[#allocation13 + $0x48] sm:$0xff]
    %v1067 = vld [vmem:[#allocation13 + $0x50] sm:$0xff]
    %v1068 = vld [vmem:[#allocation13 + $0x58] sm:$0xff]
    %v1069 = vld [vmem:[#allocation13 + $0x60] sm:$0xff]
    %v1070 = vld [vmem:[#allocation13 + $0x68] sm:$0xff]
    %v1071 = vld [vmem:[#allocation13 + $0x70] sm:$0xff]
    %v1072 = vld [vmem:[#allocation13 + $0x78] sm:$0xff]
    %v1073 = vld [vmem:[#allocation13 + $0x80] sm:$0xff]
    %v1074 = vld [vmem:[#allocation13 + $0x88] sm:$0xff]
    %v1075 = vld [vmem:[#allocation13 + $0x90] sm:$0xff]
    %v1076 = vld [vmem:[#allocation13 + $0x98] sm:$0xff]
    %v1077 = vld [vmem:[#allocation13 + $0xa0] sm:$0xff]
    %v1078 = vld [vmem:[#allocation13 + $0xa8] sm:$0xff]
    %v1079 = vld [vmem:[#allocation13 + $0xb0] sm:$0xff]
    %v1080 = vld [vmem:[#allocation13 + $0xb8] sm:$0xff]
    %v1081 = vld [vmem:[#allocation13 + $0xc0] sm:$0xff]
    %v1082 = vld [vmem:[#allocation13 + $0xc8] sm:$0xff]
    %v1083 = vld [vmem:[#allocation13 + $0xd0] sm:$0xff]
    %v1084 = vld [vmem:[#allocation13 + $0xd8] sm:$0xff]
    %v1085 = vld [vmem:[#allocation13 + $0xe0] sm:$0xff]
    %v1086 = vld [vmem:[#allocation13 + $0xe8] sm:$0xff]
    %v1087 = vld [vmem:[#allocation13 + $0xf0] sm:$0xff]
    %v1088 = vld [vmem:[#allocation13 + $0xf8] sm:$0xff]
    %v1089 = vld [vmem:[#allocation13 + $0x100] sm:$0xff]
    %v1090 = vld [vmem:[#allocation13 + $0x108] sm:$0xff]
    %v1091 = vld [vmem:[#allocation13 + $0x110] sm:$0xff]
    %v1092 = vld [vmem:[#allocation13 + $0x118] sm:$0xff]
    %v1093 = vld [vmem:[#allocation13 + $0x120] sm:$0xff]
    %v1094 = vld [vmem:[#allocation13 + $0x128] sm:$0xff]
    %v1095 = vld [vmem:[#allocation13 + $0x130] sm:$0xff]
    %v1096 = vld [vmem:[#allocation13 + $0x138] sm:$0xff]
    %v1097 = vld [vmem:[#allocation13 + $0x140] sm:$0xff]
    %v1098 = vld [vmem:[#allocation13 + $0x148] sm:$0xff]
    %v1099 = vld [vmem:[#allocation13 + $0x150] sm:$0xff]
    %v1100 = vld [vmem:[#allocation13 + $0x158] sm:$0xff]
    %v1101 = vld [vmem:[#allocation13 + $0x160] sm:$0xff]
    %v1102 = vld [vmem:[#allocation13 + $0x168] sm:$0xff]
    %v1103 = vld [vmem:[#allocation13 + $0x170] sm:$0xff]
    %v1104 = vld [vmem:[#allocation13 + $0x178] sm:$0xff]
    %v1105 = vld [vmem:[#allocation13 + $0x180] sm:$0xff]
    %v1106 = vld [vmem:[#allocation13 + $0x188] sm:$0xff]
    %v1107 = vld [vmem:[#allocation13 + $0x190] sm:$0xff]
    %v1108 = vld [vmem:[#allocation13 + $0x198] sm:$0xff]
    %v1109 = vld [vmem:[#allocation13 + $0x1a0] sm:$0xff]
    %v1110 = vld [vmem:[#allocation13 + $0x1a8] sm:$0xff]
    %v1111 = vld [vmem:[#allocation13 + $0x1b0] sm:$0xff]
    %v1112 = vld [vmem:[#allocation13 + $0x1b8] sm:$0xff]
    %v1113 = vld [vmem:[#allocation13 + $0x1c0] sm:$0xff]
    %v1114 = vld [vmem:[#allocation13 + $0x1c8] sm:$0xff]
    %v1115 = vld [vmem:[#allocation13 + $0x1d0] sm:$0xff]
    %v1116 = vld [vmem:[#allocation13 + $0x1d8] sm:$0xff]
    %v1117 = vld [vmem:[#allocation13 + $0x1e0] sm:$0xff]
    %v1118 = vld [vmem:[#allocation13 + $0x1e8] sm:$0xff]
    %v1119 = vld [vmem:[#allocation13 + $0x1f0] sm:$0xff]
    %v1120 = vld [vmem:[#allocation13 + $0x1f8] sm:$0xff]
    %v1121 = vld [vmem:[%s8] sm:$0x3]
    %v1123 = vlaneseq
    %v1124 = vshrl.u32 %v1123, 7
    %v1125 = vsub.s32 0, %v1124
    %v1126 = vrot.slane %v1121, %v1125
    %v1127 = vlaneseq
    %v1128 = vshrl.u32 %v1127, 7
    %v1129 = vsub.s32 1, %v1128
    %v1130 = vrot.slane %v1121, %v1129
    %v1197 = vunpack.c.l.b16 %v1057
    %v1198 = vunpack.c.h.b16 %v1057
    %v1199 = vunpack.c.l.b16 %v1058
    %v1200 = vunpack.c.h.b16 %v1058
    %v1201 = vunpack.c.l.b16 %v1059
    %v1202 = vunpack.c.h.b16 %v1059
    %v1203 = vunpack.c.l.b16 %v1060
    %v1204 = vunpack.c.h.b16 %v1060
    %v1205 = vunpack.c.l.b16 %v1061
    %v1206 = vunpack.c.h.b16 %v1061
    %v1207 = vunpack.c.l.b16 %v1062
    %v1208 = vunpack.c.h.b16 %v1062
    %v1209 = vunpack.c.l.b16 %v1063
    %v1210 = vunpack.c.h.b16 %v1063
    %v1211 = vunpack.c.l.b16 %v1064
    %v1212 = vunpack.c.h.b16 %v1064
    %v1213 = vunpack.c.l.b16 %v1065
    %v1214 = vunpack.c.h.b16 %v1065
    %v1215 = vunpack.c.l.b16 %v1066
    %v1216 = vunpack.c.h.b16 %v1066
    %v1217 = vunpack.c.l.b16 %v1067
    %v1218 = vunpack.c.h.b16 %v1067
    %v1219 = vunpack.c.l.b16 %v1068
    %v1220 = vunpack.c.h.b16 %v1068
    %v1221 = vunpack.c.l.b16 %v1069
    %v1222 = vunpack.c.h.b16 %v1069
    %v1223 = vunpack.c.l.b16 %v1070
    %v1224 = vunpack.c.h.b16 %v1070
    %v1225 = vunpack.c.l.b16 %v1071
    %v1226 = vunpack.c.h.b16 %v1071
    %v1227 = vunpack.c.l.b16 %v1072
    %v1228 = vunpack.c.h.b16 %v1072
    %v1229 = vunpack.c.l.b16 %v1073
    %v1230 = vunpack.c.h.b16 %v1073
    %v1231 = vunpack.c.l.b16 %v1074
    %v1232 = vunpack.c.h.b16 %v1074
    %v1233 = vunpack.c.l.b16 %v1075
    %v1234 = vunpack.c.h.b16 %v1075
    %v1235 = vunpack.c.l.b16 %v1076
    %v1236 = vunpack.c.h.b16 %v1076
    %v1237 = vunpack.c.l.b16 %v1077
    %v1238 = vunpack.c.h.b16 %v1077
    %v1239 = vunpack.c.l.b16 %v1078
    %v1240 = vunpack.c.h.b16 %v1078
    %v1241 = vunpack.c.l.b16 %v1079
    %v1242 = vunpack.c.h.b16 %v1079
    %v1243 = vunpack.c.l.b16 %v1080
    %v1244 = vunpack.c.h.b16 %v1080
    %v1245 = vunpack.c.l.b16 %v1081
    %v1246 = vunpack.c.h.b16 %v1081
    %v1247 = vunpack.c.l.b16 %v1082
    %v1248 = vunpack.c.h.b16 %v1082
    %v1249 = vunpack.c.l.b16 %v1083
    %v1250 = vunpack.c.h.b16 %v1083
    %v1251 = vunpack.c.l.b16 %v1084
    %v1252 = vunpack.c.h.b16 %v1084
    %v1253 = vunpack.c.l.b16 %v1085
    %v1254 = vunpack.c.h.b16 %v1085
    %v1255 = vunpack.c.l.b16 %v1086
    %v1256 = vunpack.c.h.b16 %v1086
    %v1257 = vunpack.c.l.b16 %v1087
    %v1258 = vunpack.c.h.b16 %v1087
    %v1259 = vunpack.c.l.b16 %v1088
    %v1260 = vunpack.c.h.b16 %v1088
    %v1261 = vunpack.c.l.b16 %v1089
    %v1262 = vunpack.c.h.b16 %v1089
    %v1263 = vunpack.c.l.b16 %v1090
    %v1264 = vunpack.c.h.b16 %v1090
    %v1265 = vunpack.c.l.b16 %v1091
    %v1266 = vunpack.c.h.b16 %v1091
    %v1267 = vunpack.c.l.b16 %v1092
    %v1268 = vunpack.c.h.b16 %v1092
    %v1269 = vunpack.c.l.b16 %v1093
    %v1270 = vunpack.c.h.b16 %v1093
    %v1271 = vunpack.c.l.b16 %v1094
    %v1272 = vunpack.c.h.b16 %v1094
    %v1273 = vunpack.c.l.b16 %v1095
    %v1274 = vunpack.c.h.b16 %v1095
    %v1275 = vunpack.c.l.b16 %v1096
    %v1276 = vunpack.c.h.b16 %v1096
    %v1277 = vunpack.c.l.b16 %v1097
    %v1278 = vunpack.c.h.b16 %v1097
    %v1279 = vunpack.c.l.b16 %v1098
    %v1280 = vunpack.c.h.b16 %v1098
    %v1281 = vunpack.c.l.b16 %v1099
    %v1282 = vunpack.c.h.b16 %v1099
    %v1283 = vunpack.c.l.b16 %v1100
    %v1284 = vunpack.c.h.b16 %v1100
    %v1285 = vunpack.c.l.b16 %v1101
    %v1286 = vunpack.c.h.b16 %v1101
    %v1287 = vunpack.c.l.b16 %v1102
    %v1288 = vunpack.c.h.b16 %v1102
    %v1289 = vunpack.c.l.b16 %v1103
    %v1290 = vunpack.c.h.b16 %v1103
    %v1291 = vunpack.c.l.b16 %v1104
    %v1292 = vunpack.c.h.b16 %v1104
    %v1293 = vunpack.c.l.b16 %v1105
    %v1294 = vunpack.c.h.b16 %v1105
    %v1295 = vunpack.c.l.b16 %v1106
    %v1296 = vunpack.c.h.b16 %v1106
    %v1297 = vunpack.c.l.b16 %v1107
    %v1298 = vunpack.c.h.b16 %v1107
    %v1299 = vunpack.c.l.b16 %v1108
    %v1300 = vunpack.c.h.b16 %v1108
    %v1301 = vunpack.c.l.b16 %v1109
    %v1302 = vunpack.c.h.b16 %v1109
    %v1303 = vunpack.c.l.b16 %v1110
    %v1304 = vunpack.c.h.b16 %v1110
    %v1305 = vunpack.c.l.b16 %v1111
    %v1306 = vunpack.c.h.b16 %v1111
    %v1307 = vunpack.c.l.b16 %v1112
    %v1308 = vunpack.c.h.b16 %v1112
    %v1309 = vunpack.c.l.b16 %v1113
    %v1310 = vunpack.c.h.b16 %v1113
    %v1311 = vunpack.c.l.b16 %v1114
    %v1312 = vunpack.c.h.b16 %v1114
    %v1313 = vunpack.c.l.b16 %v1115
    %v1314 = vunpack.c.h.b16 %v1115
    %v1315 = vunpack.c.l.b16 %v1116
    %v1316 = vunpack.c.h.b16 %v1116
    %v1317 = vunpack.c.l.b16 %v1117
    %v1318 = vunpack.c.h.b16 %v1117
    %v1319 = vunpack.c.l.b16 %v1118
    %v1320 = vunpack.c.h.b16 %v1118
    %v1321 = vunpack.c.l.b16 %v1119
    %v1322 = vunpack.c.h.b16 %v1119
    %v1323 = vunpack.c.l.b16 %v1120
    %v1324 = vunpack.c.h.b16 %v1120
    %v1325 = vpack.c.b16 %v1199, %v1197
    %v1326 = vpack.c.b16 %v1200, %v1198
    %v1327 = vpack.c.b16 %v1203, %v1201
    %v1328 = vpack.c.b16 %v1204, %v1202
    %v1329 = vpack.c.b16 %v1207, %v1205
    %v1330 = vpack.c.b16 %v1208, %v1206
    %v1331 = vpack.c.b16 %v1211, %v1209
    %v1332 = vpack.c.b16 %v1212, %v1210
    %v1333 = vpack.c.b16 %v1215, %v1213
    %v1334 = vpack.c.b16 %v1216, %v1214
    %v1335 = vpack.c.b16 %v1219, %v1217
    %v1336 = vpack.c.b16 %v1220, %v1218
    %v1337 = vpack.c.b16 %v1223, %v1221
    %v1338 = vpack.c.b16 %v1224, %v1222
    %v1339 = vpack.c.b16 %v1227, %v1225
    %v1340 = vpack.c.b16 %v1228, %v1226
    %v1341 = vpack.c.b16 %v1231, %v1229
    %v1342 = vpack.c.b16 %v1232, %v1230
    %v1343 = vpack.c.b16 %v1235, %v1233
    %v1344 = vpack.c.b16 %v1236, %v1234
    %v1345 = vpack.c.b16 %v1239, %v1237
    %v1346 = vpack.c.b16 %v1240, %v1238
    %v1347 = vpack.c.b16 %v1243, %v1241
    %v1348 = vpack.c.b16 %v1244, %v1242
    %v1349 = vpack.c.b16 %v1247, %v1245
    %v1350 = vpack.c.b16 %v1248, %v1246
    %v1351 = vpack.c.b16 %v1251, %v1249
    %v1352 = vpack.c.b16 %v1252, %v1250
    %v1353 = vpack.c.b16 %v1255, %v1253
    %v1354 = vpack.c.b16 %v1256, %v1254
    %v1355 = vpack.c.b16 %v1259, %v1257
    %v1356 = vpack.c.b16 %v1260, %v1258
    %v1357 = vpack.c.b16 %v1263, %v1261
    %v1358 = vpack.c.b16 %v1264, %v1262
    %v1359 = vpack.c.b16 %v1267, %v1265
    %v1360 = vpack.c.b16 %v1268, %v1266
    %v1361 = vpack.c.b16 %v1271, %v1269
    %v1362 = vpack.c.b16 %v1272, %v1270
    %v1363 = vpack.c.b16 %v1275, %v1273
    %v1364 = vpack.c.b16 %v1276, %v1274
    %v1365 = vpack.c.b16 %v1279, %v1277
    %v1366 = vpack.c.b16 %v1280, %v1278
    %v1367 = vpack.c.b16 %v1283, %v1281
    %v1368 = vpack.c.b16 %v1284, %v1282
    %v1369 = vpack.c.b16 %v1287, %v1285
    %v1370 = vpack.c.b16 %v1288, %v1286
    %v1371 = vpack.c.b16 %v1291, %v1289
    %v1372 = vpack.c.b16 %v1292, %v1290
    %v1373 = vpack.c.b16 %v1295, %v1293
    %v1374 = vpack.c.b16 %v1296, %v1294
    %v1375 = vpack.c.b16 %v1299, %v1297
    %v1376 = vpack.c.b16 %v1300, %v1298
    %v1377 = vpack.c.b16 %v1303, %v1301
    %v1378 = vpack.c.b16 %v1304, %v1302
    %v1379 = vpack.c.b16 %v1307, %v1305
    %v1380 = vpack.c.b16 %v1308, %v1306
    %v1381 = vpack.c.b16 %v1311, %v1309
    %v1382 = vpack.c.b16 %v1312, %v1310
    %v1383 = vpack.c.b16 %v1315, %v1313
    %v1384 = vpack.c.b16 %v1316, %v1314
    %v1385 = vpack.c.b16 %v1319, %v1317
    %v1386 = vpack.c.b16 %v1320, %v1318
    %v1387 = vpack.c.b16 %v1323, %v1321
    %v1388 = vpack.c.b16 %v1324, %v1322
    %1453 = vmatprep.subr.bf16.mxu0 %v1340
    %1454 = vmatpush1.bf16.msra.mxu0 %v1339
    %1455 = vmatprep.subr.bf16.mxu0 %v1338
    %1456 = vmatpush1.bf16.msra.mxu0 %v1337
    %1457 = vmatprep.subr.bf16.mxu0 %v1336
    %1458 = vmatpush1.bf16.msra.mxu0 %v1335
    %1459 = vmatprep.subr.bf16.mxu0 %v1334
    %1460 = vmatpush1.bf16.msra.mxu0 %v1333
    %1461 = vmatprep.subr.bf16.mxu0 %v1332
    %1462 = vmatpush1.bf16.msra.mxu0 %v1331
    %1463 = vmatprep.subr.bf16.mxu0 %v1330
    %1464 = vmatpush1.bf16.msra.mxu0 %v1329
    %1465 = vmatprep.subr.bf16.mxu0 %v1328
    %1466 = vmatpush1.bf16.msra.mxu0 %v1327
    %1467 = vmatprep.subr.bf16.mxu0 %v1326
    %1468 = vmatpush1.bf16.msra.mxu0 %v1325
    %1469 = vmatprep.subr.bf16.mxu0 %v1356
    %1470 = vmatpush2.bf16.msra.mxu0 %v1355
    %1471 = vmatprep.subr.bf16.mxu0 %v1354
    %1472 = vmatpush2.bf16.msra.mxu0 %v1353
    %1473 = vmatprep.subr.bf16.mxu0 %v1352
    %1474 = vmatpush2.bf16.msra.mxu0 %v1351
    %1475 = vmatprep.subr.bf16.mxu0 %v1350
    %1476 = vmatpush2.bf16.msra.mxu0 %v1349
    %1477 = vmatprep.subr.bf16.mxu0 %v1348
    %1478 = vmatpush2.bf16.msra.mxu0 %v1347
    %1479 = vmatprep.subr.bf16.mxu0 %v1346
    %1480 = vmatpush2.bf16.msra.mxu0 %v1345
    %1481 = vmatprep.subr.bf16.mxu0 %v1344
    %1482 = vmatpush2.bf16.msra.mxu0 %v1343
    %1483 = vmatprep.subr.bf16.mxu0 %v1342
    %1484 = vmatpush2.bf16.msra.mxu0 %v1341
    %1485 = vmatprep.mubr.bf16.mxu0 %v1054
    %1486 = vmatmul.mubr.bf16.gmra.mxu0 %v1053
    %v1487 = vpop.f32.mrf.mxu0
    %v1488 = vadd.f32 %v1126, %v1487
    %v1489 = vpop.f32.mrf.mxu0
    %v1490 = vadd.f32 %v1130, %v1489
    %v1491 = vpop.f32.mrf.mxu0
    %v1492 = vadd.f32 %v1126, %v1491
    %v1493 = vpop.f32.mrf.mxu0
    %v1494 = vadd.f32 %v1130, %v1493
    %1495 = vdwg.mxu0
    %1496 = vmatprep.subr.bf16.mxu0 %v1372
    %1497 = vmatpush1.bf16.msra.mxu0 %v1371
    %1498 = vmatprep.subr.bf16.mxu0 %v1370
    %1499 = vmatpush1.bf16.msra.mxu0 %v1369
    %1500 = vmatprep.subr.bf16.mxu0 %v1368
    %1501 = vmatpush1.bf16.msra.mxu0 %v1367
    %1502 = vmatprep.subr.bf16.mxu0 %v1366
    %1503 = vmatpush1.bf16.msra.mxu0 %v1365
    %1504 = vmatprep.subr.bf16.mxu0 %v1364
    %1505 = vmatpush1.bf16.msra.mxu0 %v1363
    %1506 = vmatprep.subr.bf16.mxu0 %v1362
    %1507 = vmatpush1.bf16.msra.mxu0 %v1361
    %1508 = vmatprep.subr.bf16.mxu0 %v1360
    %1509 = vmatpush1.bf16.msra.mxu0 %v1359
    %1510 = vmatprep.subr.bf16.mxu0 %v1358
    %1511 = vmatpush1.bf16.msra.mxu0 %v1357
    %1512 = vmatprep.subr.bf16.mxu0 %v1388
    %1513 = vmatpush2.bf16.msra.mxu0 %v1387
    %1514 = vmatprep.subr.bf16.mxu0 %v1386
    %1515 = vmatpush2.bf16.msra.mxu0 %v1385
    %1516 = vmatprep.subr.bf16.mxu0 %v1384
    %1517 = vmatpush2.bf16.msra.mxu0 %v1383
    %1518 = vmatprep.subr.bf16.mxu0 %v1382
    %1519 = vmatpush2.bf16.msra.mxu0 %v1381
    %1520 = vmatprep.subr.bf16.mxu0 %v1380
    %1521 = vmatpush2.bf16.msra.mxu0 %v1379
    %1522 = vmatprep.subr.bf16.mxu0 %v1378
    %1523 = vmatpush2.bf16.msra.mxu0 %v1377
    %1524 = vmatprep.subr.bf16.mxu0 %v1376
    %1525 = vmatpush2.bf16.msra.mxu0 %v1375
    %1526 = vmatprep.subr.bf16.mxu0 %v1374
    %1527 = vmatpush2.bf16.msra.mxu0 %v1373
    %1528 = vmatprep.mubr.bf16.mxu0 %v1056
    %1529 = vmatmul.mubr.bf16.gmra.mxu0 %v1055
    %v1530 = vpop.f32.mrf.mxu0
    %v1531 = vadd.f32 %v1488, %v1530
    %v1532 = vpop.f32.mrf.mxu0
    %v1533 = vadd.f32 %v1490, %v1532
    %v1534 = vpop.f32.mrf.mxu0
    %v1535 = vadd.f32 %v1492, %v1534
    %v1536 = vpop.f32.mrf.mxu0
    %v1537 = vadd.f32 %v1494, %v1536
    %1538 = vdwg.mxu0
    %v1539 = vmax.f32 %v1531, 0.0
    %v1540 = vmax.f32 %v1533, 0.0
    %v1541 = vmax.f32 %v1535, 0.0
    %v1542 = vmax.f32 %v1537, 0.0
    %v1543 = vpack.c.bf16 %v1541, %v1539
    %v1544 = vpack.c.bf16 %v1542, %v1540
    %v1545 = vld [vmem:[#allocation14] sm:$0xf]
    %v1546 = vld [vmem:[#allocation14 + $0x4] sm:$0xf]
    %v1547 = vld [vmem:[#allocation14 + $0x8] sm:$0xf]
    %v1548 = vld [vmem:[#allocation14 + $0xc] sm:$0xf]
    %v1549 = vld [vmem:[#allocation14 + $0x10] sm:$0xf]
    %v1550 = vld [vmem:[#allocation14 + $0x14] sm:$0xf]
    %v1551 = vld [vmem:[#allocation14 + $0x18] sm:$0xf]
    %v1552 = vld [vmem:[#allocation14 + $0x1c] sm:$0xf]
    %v1553 = vld [vmem:[#allocation14 + $0x20] sm:$0xf]
    %v1554 = vld [vmem:[#allocation14 + $0x24] sm:$0xf]
    %v1555 = vld [vmem:[#allocation14 + $0x28] sm:$0xf]
    %v1556 = vld [vmem:[#allocation14 + $0x2c] sm:$0xf]
    %v1557 = vld [vmem:[#allocation14 + $0x30] sm:$0xf]
    %v1558 = vld [vmem:[#allocation14 + $0x34] sm:$0xf]
    %v1559 = vld [vmem:[#allocation14 + $0x38] sm:$0xf]
    %v1560 = vld [vmem:[#allocation14 + $0x3c] sm:$0xf]
    %v1561 = vld [vmem:[#allocation14 + $0x40] sm:$0xf]
    %v1562 = vld [vmem:[#allocation14 + $0x44] sm:$0xf]
    %v1563 = vld [vmem:[#allocation14 + $0x48] sm:$0xf]
    %v1564 = vld [vmem:[#allocation14 + $0x4c] sm:$0xf]
    %v1565 = vld [vmem:[#allocation14 + $0x50] sm:$0xf]
    %v1566 = vld [vmem:[#allocation14 + $0x54] sm:$0xf]
    %v1567 = vld [vmem:[#allocation14 + $0x58] sm:$0xf]
    %v1568 = vld [vmem:[#allocation14 + $0x5c] sm:$0xf]
    %v1569 = vld [vmem:[#allocation14 + $0x60] sm:$0xf]
    %v1570 = vld [vmem:[#allocation14 + $0x64] sm:$0xf]
    %v1571 = vld [vmem:[#allocation14 + $0x68] sm:$0xf]
    %v1572 = vld [vmem:[#allocation14 + $0x6c] sm:$0xf]
    %v1573 = vld [vmem:[#allocation14 + $0x70] sm:$0xf]
    %v1574 = vld [vmem:[#allocation14 + $0x74] sm:$0xf]
    %v1575 = vld [vmem:[#allocation14 + $0x78] sm:$0xf]
    %v1576 = vld [vmem:[#allocation14 + $0x7c] sm:$0xf]
    %v1577 = vld [vmem:[%s10] sm:$0x1]
    %v1579 = vlaneseq
    %v1580 = vshrl.u32 %v1579, 7
    %v1581 = vsub.s32 0, %v1580
    %v1582 = vrot.slane %v1577, %v1581
    %v1616 = vunpack.c.l.b16 %v1545
    %v1617 = vunpack.c.l.b16 %v1546
    %v1618 = vunpack.c.l.b16 %v1547
    %v1619 = vunpack.c.l.b16 %v1548
    %v1620 = vunpack.c.l.b16 %v1549
    %v1621 = vunpack.c.l.b16 %v1550
    %v1622 = vunpack.c.l.b16 %v1551
    %v1623 = vunpack.c.l.b16 %v1552
    %v1624 = vunpack.c.l.b16 %v1553
    %v1625 = vunpack.c.l.b16 %v1554
    %v1626 = vunpack.c.l.b16 %v1555
    %v1627 = vunpack.c.l.b16 %v1556
    %v1628 = vunpack.c.l.b16 %v1557
    %v1629 = vunpack.c.l.b16 %v1558
    %v1630 = vunpack.c.l.b16 %v1559
    %v1631 = vunpack.c.l.b16 %v1560
    %v1632 = vunpack.c.l.b16 %v1561
    %v1633 = vunpack.c.l.b16 %v1562
    %v1634 = vunpack.c.l.b16 %v1563
    %v1635 = vunpack.c.l.b16 %v1564
    %v1636 = vunpack.c.l.b16 %v1565
    %v1637 = vunpack.c.l.b16 %v1566
    %v1638 = vunpack.c.l.b16 %v1567
    %v1639 = vunpack.c.l.b16 %v1568
    %v1640 = vunpack.c.l.b16 %v1569
    %v1641 = vunpack.c.l.b16 %v1570
    %v1642 = vunpack.c.l.b16 %v1571
    %v1643 = vunpack.c.l.b16 %v1572
    %v1644 = vunpack.c.l.b16 %v1573
    %v1645 = vunpack.c.l.b16 %v1574
    %v1646 = vunpack.c.l.b16 %v1575
    %v1647 = vunpack.c.l.b16 %v1576
    %v1648 = vpack.c.b16 %v1617, %v1616
    %v1649 = vpack.c.b16 %v1619, %v1618
    %v1650 = vpack.c.b16 %v1621, %v1620
    %v1651 = vpack.c.b16 %v1623, %v1622
    %v1652 = vpack.c.b16 %v1625, %v1624
    %v1653 = vpack.c.b16 %v1627, %v1626
    %v1654 = vpack.c.b16 %v1629, %v1628
    %v1655 = vpack.c.b16 %v1631, %v1630
    %v1656 = vpack.c.b16 %v1633, %v1632
    %v1657 = vpack.c.b16 %v1635, %v1634
    %v1658 = vpack.c.b16 %v1637, %v1636
    %v1659 = vpack.c.b16 %v1639, %v1638
    %v1660 = vpack.c.b16 %v1641, %v1640
    %v1661 = vpack.c.b16 %v1643, %v1642
    %v1662 = vpack.c.b16 %v1645, %v1644
    %v1663 = vpack.c.b16 %v1647, %v1646
    %1680 = vmatprep.subr.bf16.mxu0 0
    %1681 = vmatpush1.bf16.msra.mxu0 %v1655
    %1682 = vmatprep.subr.bf16.mxu0 0
    %1683 = vmatpush1.bf16.msra.mxu0 %v1654
    %1684 = vmatprep.subr.bf16.mxu0 0
    %1685 = vmatpush1.bf16.msra.mxu0 %v1653
    %1686 = vmatprep.subr.bf16.mxu0 0
    %1687 = vmatpush1.bf16.msra.mxu0 %v1652
    %1688 = vmatprep.subr.bf16.mxu0 0
    %1689 = vmatpush1.bf16.msra.mxu0 %v1651
    %1690 = vmatprep.subr.bf16.mxu0 0
    %1691 = vmatpush1.bf16.msra.mxu0 %v1650
    %1692 = vmatprep.subr.bf16.mxu0 0
    %1693 = vmatpush1.bf16.msra.mxu0 %v1649
    %1694 = vmatprep.subr.bf16.mxu0 0
    %1695 = vmatpush1.bf16.msra.mxu0 %v1648
    %1696 = vmatprep.subr.bf16.mxu0 0
    %1697 = vmatpush2.bf16.msra.mxu0 %v1663
    %1698 = vmatprep.subr.bf16.mxu0 0
    %1699 = vmatpush2.bf16.msra.mxu0 %v1662
    %1700 = vmatprep.subr.bf16.mxu0 0
    %1701 = vmatpush2.bf16.msra.mxu0 %v1661
    %1702 = vmatprep.subr.bf16.mxu0 0
    %1703 = vmatpush2.bf16.msra.mxu0 %v1660
    %1704 = vmatprep.subr.bf16.mxu0 0
    %1705 = vmatpush2.bf16.msra.mxu0 %v1659
    %1706 = vmatprep.subr.bf16.mxu0 0
    %1707 = vmatpush2.bf16.msra.mxu0 %v1658
    %1708 = vmatprep.subr.bf16.mxu0 0
    %1709 = vmatpush2.bf16.msra.mxu0 %v1657
    %1710 = vmatprep.subr.bf16.mxu0 0
    %1711 = vmatpush2.bf16.msra.mxu0 %v1656
    %1712 = vmatprep.mubr.bf16.mxu0 %v1544
    %1713 = vmatmul.mubr.bf16.gmra.mxu0 %v1543
    %v1714 = vpop.f32.mrf.mxu0
    %v1715 = vadd.f32 %v1582, %v1714
    %v1716 = vpop.f32.mrf.mxu0
    %v1717 = vpop.f32.mrf.mxu0
    %v1718 = vadd.f32 %v1582, %v1717
    %v1719 = vpop.f32.mrf.mxu0
    %1720 = vdwg.mxu0
    %v1721 = vmax.f32 %v1715, 0.0
    %v1722 = vmax.f32 %v1718, 0.0
    %1723 = vst [vmem:[#allocation16] sm:$0xff] %v1721
    %1724 = vst [vmem:[#allocation16 + $0x8] sm:$0xff] %v1722
    // Predicated region
    $region78: #{tpu_custom_call.1} parent=1 // pred_check
      _
    $region79: #{tpu_custom_call.1} parent=1 // pred_check_branch
      %1726 = sbr.rel (0) target = $region81
    $region80: #{tpu_custom_call.1} parent=1 // pred_region
      %s1728 = ssub.s32 256, 256
      %1729 = vsyncadd [#allocation4], %s1728
      %s1730 = sshll.u32 [#allocation16], 4
      %s1731 = int_to_ptr.vmem [resolvable:$true] %s1730
      %1736 = dma.vmem_to_hbm [thread:$0]  %s1731, 256, %s11, [#allocation4], 128, 128, 8
    $region81: #{tpu_custom_call.1} parent=1 // pred_fallthru
      _
    // Predicated region
    $region82: #{tpu_custom_call.1} parent=1 // pred_check
      _
    $region83: #{tpu_custom_call.1} parent=1 // pred_check_branch
      %1738 = sbr.rel (0) target = $region85
    $region84: #{tpu_custom_call.1} parent=1 // pred_region
      %1739 = dma.done [#allocation4], 256
    $region85: #{tpu_custom_call.1} parent=1 // pred_fallthru
      _
    %1740 = vsyncpa [#allocation3], 1
    %1741 = vsyncpa [#allocation6], 1
    %1742 = vsyncpa [#allocation9], 1
    %1743 = vsyncpa [#allocation12], 1
    %1744 = vsyncpa [#allocation15], 1
    %1745 = vsyncpa [#allocation4], 1

</llo_original>
